<compile_context>
chip_gen: v6e
topology: v6e:2x2x1
jax: 0.10.0
libtpu: 0.0.40
codegen_flags: <defaults>
</compile_context>

<pallas_src>
import functools

import jax
import jax.numpy as jnp
from jax.experimental import pallas as pl
from jax.experimental.pallas import tpu as pltpu

LANE = 128  # output lane width per head (lane-dense stores)


def _round_up(x, m):
    return ((x + m - 1) // m) * m


# ----------------------------------------------------------------------------
# Single fused Pallas kernel: both heads, shared first-layer matmul.
# ----------------------------------------------------------------------------
def fused_heads_kernel(dom_ref,                 # scalar-prefetch (used only by index_maps)
                       x_ref, w1_ref, b1_ref, w2_ref, b2_ref,
                       w3_ref, b3_ref, dw2_ref, db2_ref, o_ref, *, h1_dim):
    """y_cls = relu(relu(x@W1c'+b1c') @ W2' + b2') @ W3p + b3p   (DS-BN folded)
       y_dom = relu(x@W1d + b1d) @ Wd2p + bd2p                   (frozen head)

    Layer-1 weights of both heads are concatenated along the output dim so x
    is pushed through the MXU exactly once.  Outputs are written lane-dense
    into one (TM, 256) slab: cols [0,128) classifier logits (padded),
    cols [128,256) domain logits (padded).
    """
    del dom_ref
    x = x_ref[...]                                                     # (TM, F) bf16
    h1 = jnp.dot(x, w1_ref[0], preferred_element_type=jnp.float32) + b1_ref[0]
    h1 = jnp.maximum(h1, 0.0)                                          # f32 epilogue
    h_cls = h1[:, :h1_dim].astype(jnp.bfloat16)                        # classifier branch
    h_dom = h1[:, h1_dim:].astype(jnp.bfloat16)                        # frozen domain branch
    h2 = jnp.dot(h_cls, w2_ref[0], preferred_element_type=jnp.float32) + b2_ref[0]
    h2 = jnp.maximum(h2, 0.0).astype(jnp.bfloat16)
    # lane-dense, 128-aligned stores (unmasked vst)
    o_ref[:, :LANE] = (jnp.dot(h2, w3_ref[...],
                               preferred_element_type=jnp.float32) + b3_ref[...])
    o_ref[:, LANE:2 * LANE] = (jnp.dot(h_dom, dw2_ref[...],
                                       preferred_element_type=jnp.float32) + db2_ref[...])


# ----------------------------------------------------------------------------
# Model: parameter construction (with BN folding + head fusion) + forward
# ----------------------------------------------------------------------------
class PallasModel:
    def __init__(self, in_shape=(3, 16, 16), n_cls=10,
                 fc_hidden_dims=(256, 128), d_hidden=128, n_domains=2,
                 bn_eps=1e-5, seed=0):
        assert n_cls <= LANE and n_domains <= LANE
        self.in_shape = in_shape
        self.n_cls = n_cls
        self.n_domains = n_domains
        C, H, W = in_shape
        F = C * H * W
        H1, H2 = fc_hidden_dims
        self.F, self.H1, self.H2, self.DH = F, H1, H2, d_hidden

        key = jax.random.PRNGKey(seed)
        ks = jax.random.split(key, 12)

        def init_w(k, fi, fo):
            return jax.random.normal(k, (fi, fo), jnp.float32) * (1.0 / jnp.sqrt(fi))

        # ---- Classifier (fc -> DS-BN -> relu -> fc -> DS-BN -> relu -> fc) ----
        c_w1 = init_w(ks[0], F, H1);     c_b1 = jnp.zeros((H1,), jnp.float32)
        c_w2 = init_w(ks[1], H1, H2);    c_b2 = jnp.zeros((H2,), jnp.float32)
        c_w3 = init_w(ks[2], H2, n_cls); c_b3 = jnp.zeros((n_cls,), jnp.float32)
        # domain-specific BN (eval mode) parameters + running stats
        g1 = 1.0 + 0.01 * jax.random.normal(ks[3], (n_domains, H1), jnp.float32)
        be1 = 0.01 * jax.random.normal(ks[4], (n_domains, H1), jnp.float32)
        g2 = 1.0 + 0.01 * jax.random.normal(ks[5], (n_domains, H2), jnp.float32)
        be2 = 0.01 * jax.random.normal(ks[6], (n_domains, H2), jnp.float32)
        rm1 = jnp.zeros((n_domains, H1), jnp.float32)
        rv1 = jnp.ones((n_domains, H1), jnp.float32)
        rm2 = jnp.zeros((n_domains, H2), jnp.float32)
        rv2 = jnp.ones((n_domains, H2), jnp.float32)

        # ---- Frozen DomainClassifier head (fc -> relu -> fc), deterministic init ----
        d_w1 = init_w(ks[7], F, d_hidden);        d_b1 = jnp.zeros((d_hidden,), jnp.float32)
        d_w2 = init_w(ks[8], d_hidden, n_domains); d_b2 = jnp.zeros((n_domains,), jnp.float32)

        # ---- Fold eval-mode DS-BN into the classifier weights (per domain) ----
        # BN(h) = (h - mean) * gamma / sqrt(var + eps) + beta
        s1 = g1 * jax.lax.rsqrt(rv1 + bn_eps)                    # (D, H1)
        s2 = g2 * jax.lax.rsqrt(rv2 + bn_eps)                    # (D, H2)
        w1_cls = c_w1[None, :, :] * s1[:, None, :]               # (D, F, H1)
        b1_cls = (c_b1[None, :] - rm1) * s1 + be1                # (D, H1)
        w2_cls = c_w2[None, :, :] * s2[:, None, :]               # (D, H1, H2)
        b2_cls = (c_b2[None, :] - rm2) * s2 + be2                # (D, H2)

        # ---- Fuse both heads' first layers so x hits the MXU once ----
        w1_dom = jnp.broadcast_to(d_w1[None], (n_domains, F, d_hidden))
        b1_dom = jnp.broadcast_to(d_b1[None], (n_domains, d_hidden))
        self.w1 = jnp.concatenate([w1_cls, w1_dom], axis=-1).astype(jnp.bfloat16)  # (D,F,H1+DH)
        self.b1 = jnp.concatenate([b1_cls, b1_dom], axis=-1)[:, None, :]            # (D,1,H1+DH) f32
        self.w2 = w2_cls.astype(jnp.bfloat16)                                       # (D,H1,H2)
        self.b2 = b2_cls[:, None, :]                                                # (D,1,H2) f32

        # ---- Lane-dense (128-wide) output heads, shared across domains ----
        self.w3p = (jnp.zeros((H2, LANE), jnp.float32)
                    .at[:, :n_cls].set(c_w3)).astype(jnp.bfloat16)
        self.b3p = jnp.zeros((1, LANE), jnp.float32).at[0, :n_cls].set(c_b3)
        self.dw2p = (jnp.zeros((d_hidden, LANE), jnp.float32)
                     .at[:, :n_domains].set(d_w2)).astype(jnp.bfloat16)
        self.db2p = jnp.zeros((1, LANE), jnp.float32).at[0, :n_domains].set(d_b2)

        # one compiled variant handles both domains (domain index is data)
        self._fwd = jax.jit(self._forward_padded)

    def _forward_padded(self, x_pad, dom_arr):
        Bp, F = x_pad.shape
        tm = Bp if Bp <= 256 else 256       # Bp is tile-aligned by __call__
        H1, H2, DH = self.H1, self.H2, self.DH

        grid_spec = pltpu.PrefetchScalarGridSpec(
            num_scalar_prefetch=1,
            grid=(Bp // tm,),
            in_specs=[
                # activations: tiled over the batch grid axis
                pl.BlockSpec((tm, F), lambda i, dom: (i, 0)),
                # per-domain folded weights: block selected by prefetched domain idx,
                # constant across the batch grid -> stays resident in VMEM
                pl.BlockSpec((1, F, H1 + DH), lambda i, dom: (dom[0], 0, 0)),
                pl.BlockSpec((1, 1, H1 + DH), lambda i, dom: (dom[0], 0, 0)),
                pl.BlockSpec((1, H1, H2), lambda i, dom: (dom[0], 0, 0)),
                pl.BlockSpec((1, 1, H2), lambda i, dom: (dom[0], 0, 0)),
                # shared lane-padded output heads
                pl.BlockSpec((H2, LANE), lambda i, dom: (0, 0)),
                pl.BlockSpec((1, LANE), lambda i, dom: (0, 0)),
                pl.BlockSpec((DH, LANE), lambda i, dom: (0, 0)),
                pl.BlockSpec((1, LANE), lambda i, dom: (0, 0)),
            ],
            out_specs=pl.BlockSpec((tm, 2 * LANE), lambda i, dom: (i, 0)),
        )
        return pl.pallas_call(
            functools.partial(fused_heads_kernel, h1_dim=H1),
            grid_spec=grid_spec,
            out_shape=jax.ShapeDtypeStruct((Bp, 2 * LANE), jnp.float32),
            compiler_params=pltpu.CompilerParams(
                dimension_semantics=("parallel",)),
        )(dom_arr, x_pad, self.w1, self.b1, self.w2, self.b2,
          self.w3p, self.b3p, self.dw2p, self.db2p)

    def __call__(self, x, d):
        # x: NCHW (B, C, H, W) float32
        B = x.shape[0]
        x_flat = x.reshape(B, -1)
        # pad batch to a multiple of 16 sublanes (bf16 activations); tile-align
        Bp = _round_up(max(B, 1), 16)
        if Bp > 256:
            Bp = _round_up(Bp, 256)
        x_pad = jnp.pad(x_flat, ((0, Bp - B), (0, 0))).astype(jnp.bfloat16)
        dom_idx = 0 if d == 'src' else 1
        dom_arr = jnp.array([dom_idx], dtype=jnp.int32)

        out = self._fwd(x_pad, dom_arr)
        y1 = out[:B, :self.n_cls]
        d1 = out[:B, LANE:LANE + self.n_domains]

        outputs = {'x': x, 'y1_lo': y1, 'd1_lo': d1}
        if d == 'src':
            outputs = {k + '_A': v for k, v in outputs.items()}
        elif d == 'tgt':
            outputs = {k + '_B': v for k, v in outputs.items()}
        return outputs


# ----------------------------------------------------------------------------
if __name__ == "__main__":
    key = jax.random.PRNGKey(0)
    B, C, H, W = 2, 3, 16, 16
    x = jax.random.normal(key, (B, C, H, W), jnp.float32)

    model = PallasModel(in_shape=(C, H, W), n_cls=10, fc_hidden_dims=(256, 128))

    out_src = model(x, 'src')
    out_tgt = model(x, 'tgt')
    jax.block_until_ready(out_src)
    jax.block_until_ready(out_tgt)

    assert set(out_src.keys()) == {'x_A', 'y1_lo_A', 'd1_lo_A'}
    assert set(out_tgt.keys()) == {'x_B', 'y1_lo_B', 'd1_lo_B'}
    assert out_src['y1_lo_A'].shape == (B, 10)
    assert out_src['d1_lo_A'].shape == (B, 2)
    assert out_tgt['y1_lo_B'].shape == (B, 10)
    assert out_tgt['d1_lo_B'].shape == (B, 2)

    print("KERNEL_OK")
</pallas_src>

<mosaic_0001>
module attributes {stable_mosaic.version = 11 : i64} {
  func.func @fused_heads_kernel(%arg0: i32, %arg1: memref<1xi32, #tpu.memory_space<smem>>, %arg2: memref<16x768xbf16, #tpu.memory_space<vmem>>, %arg3: memref<1x768x384xbf16, #tpu.memory_space<vmem>>, %arg4: memref<1x1x384xf32, #tpu.memory_space<vmem>>, %arg5: memref<1x256x128xbf16, #tpu.memory_space<vmem>>, %arg6: memref<1x1x128xf32, #tpu.memory_space<vmem>>, %arg7: memref<128x128xbf16, #tpu.memory_space<vmem>>, %arg8: memref<1x128xf32, #tpu.memory_space<vmem>>, %arg9: memref<128x128xbf16, #tpu.memory_space<vmem>>, %arg10: memref<1x128xf32, #tpu.memory_space<vmem>>, %arg11: memref<16x256xf32, #tpu.memory_space<vmem>>) attributes {dimension_semantics = [#tpu.dimension_semantics<parallel>], iteration_bounds = array<i64: 1>, scalar_prefetch = 1 : i64, scratch_operands = 0 : i64, tpu.core_type = #tpu.core_type<tc>, window_params = [{transform_indices = @transform_0, window_bounds = array<i64: 16, 768>}, {transform_indices = @transform_1, window_bounds = array<i64: 1, 768, 384>}, {transform_indices = @transform_2, window_bounds = array<i64: 1, 1, 384>}, {transform_indices = @transform_3, window_bounds = array<i64: 1, 256, 128>}, {transform_indices = @transform_4, window_bounds = array<i64: 1, 1, 128>}, {pipeline_mode = #tpu.pipeline_mode<synchronous>, transform_indices = @transform_5, window_bounds = array<i64: 128, 128>}, {pipeline_mode = #tpu.pipeline_mode<synchronous>, transform_indices = @transform_6, window_bounds = array<i64: 1, 128>}, {pipeline_mode = #tpu.pipeline_mode<synchronous>, transform_indices = @transform_7, window_bounds = array<i64: 128, 128>}, {pipeline_mode = #tpu.pipeline_mode<synchronous>, transform_indices = @transform_8, window_bounds = array<i64: 1, 128>}, {transform_indices = @transform_9, window_bounds = array<i64: 16, 256>}]} {
    %c0 = arith.constant 0 : index
    %c0_0 = arith.constant 0 : index
    %0 = vector.load %arg2[%c0, %c0_0] : memref<16x768xbf16, #tpu.memory_space<vmem>>, vector<16x768xbf16>
    %c0_1 = arith.constant 0 : index
    %c0_2 = arith.constant 0 : index
    %c0_3 = arith.constant 0 : index
    %1 = vector.load %arg3[%c0_1, %c0_2, %c0_3] : memref<1x768x384xbf16, #tpu.memory_space<vmem>>, vector<1x768x384xbf16>
    %2 = vector.shape_cast %1 : vector<1x768x384xbf16> to vector<768x384xbf16>
    %cst = arith.constant dense<0.000000e+00> : vector<16x384xf32>
    %3 = tpu.matmul %0, %2, %cst {dimension_numbers = #tpu.dot_dimension_numbers<[1], [0], [0], [1], [0, 0, 1, 1], [], []>} : vector<16x768xbf16>, vector<768x384xbf16>, vector<16x384xf32> -> vector<16x384xf32>
    %c0_4 = arith.constant 0 : index
    %c0_5 = arith.constant 0 : index
    %c0_6 = arith.constant 0 : index
    %4 = vector.load %arg4[%c0_4, %c0_5, %c0_6] : memref<1x1x384xf32, #tpu.memory_space<vmem>>, vector<1x1x384xf32>
    %5 = vector.shape_cast %4 : vector<1x1x384xf32> to vector<1x384xf32>
    %6 = vector.broadcast %5 : vector<1x384xf32> to vector<16x384xf32>
    %7 = arith.addf %3, %6 : vector<16x384xf32>
    %cst_7 = arith.constant 0.000000e+00 : f32
    %8 = vector.broadcast %cst_7 : f32 to vector<16x384xf32>
    %9 = arith.maximumf %7, %8 : vector<16x384xf32>
    %10 = vector.extract_strided_slice %9 {offsets = [0, 0], sizes = [16, 256], strides = [1, 1]} : vector<16x384xf32> to vector<16x256xf32>
    %11 = arith.truncf %10 : vector<16x256xf32> to vector<16x256xbf16>
    %12 = vector.extract_strided_slice %9 {offsets = [0, 256], sizes = [16, 128], strides = [1, 1]} : vector<16x384xf32> to vector<16x128xf32>
    %13 = arith.truncf %12 : vector<16x128xf32> to vector<16x128xbf16>
    %c0_8 = arith.constant 0 : index
    %c0_9 = arith.constant 0 : index
    %c0_10 = arith.constant 0 : index
    %14 = vector.load %arg5[%c0_8, %c0_9, %c0_10] : memref<1x256x128xbf16, #tpu.memory_space<vmem>>, vector<1x256x128xbf16>
    %15 = vector.shape_cast %14 : vector<1x256x128xbf16> to vector<256x128xbf16>
    %cst_11 = arith.constant dense<0.000000e+00> : vector<16x128xf32>
    %16 = tpu.matmul %11, %15, %cst_11 {dimension_numbers = #tpu.dot_dimension_numbers<[1], [0], [0], [1], [0, 0, 1, 1], [], []>} : vector<16x256xbf16>, vector<256x128xbf16>, vector<16x128xf32> -> vector<16x128xf32>
    %c0_12 = arith.constant 0 : index
    %c0_13 = arith.constant 0 : index
    %c0_14 = arith.constant 0 : index
    %17 = vector.load %arg6[%c0_12, %c0_13, %c0_14] : memref<1x1x128xf32, #tpu.memory_space<vmem>>, vector<1x1x128xf32>
    %18 = vector.shape_cast %17 : vector<1x1x128xf32> to vector<1x128xf32>
    %19 = vector.broadcast %18 : vector<1x128xf32> to vector<16x128xf32>
    %20 = arith.addf %16, %19 : vector<16x128xf32>
    %cst_15 = arith.constant 0.000000e+00 : f32
    %21 = vector.broadcast %cst_15 : f32 to vector<16x128xf32>
    %22 = arith.maximumf %20, %21 : vector<16x128xf32>
    %23 = arith.truncf %22 : vector<16x128xf32> to vector<16x128xbf16>
    %c0_16 = arith.constant 0 : index
    %c0_17 = arith.constant 0 : index
    %24 = vector.load %arg7[%c0_16, %c0_17] : memref<128x128xbf16, #tpu.memory_space<vmem>>, vector<128x128xbf16>
    %cst_18 = arith.constant dense<0.000000e+00> : vector<16x128xf32>
    %25 = tpu.matmul %23, %24, %cst_18 {dimension_numbers = #tpu.dot_dimension_numbers<[1], [0], [0], [1], [0, 0, 1, 1], [], []>} : vector<16x128xbf16>, vector<128x128xbf16>, vector<16x128xf32> -> vector<16x128xf32>
    %c0_19 = arith.constant 0 : index
    %c0_20 = arith.constant 0 : index
    %26 = vector.load %arg8[%c0_19, %c0_20] : memref<1x128xf32, #tpu.memory_space<vmem>>, vector<1x128xf32>
    %27 = vector.broadcast %26 : vector<1x128xf32> to vector<16x128xf32>
    %28 = arith.addf %25, %27 : vector<16x128xf32>
    %c0_21 = arith.constant 0 : index
    %c0_22 = arith.constant 0 : index
    %29 = vector.load %arg11[%c0_21, %c0_22] : memref<16x256xf32, #tpu.memory_space<vmem>>, vector<16x128xf32>
    tpu.vector_store %arg11[%c0_21, %c0_22], %28 {strides = array<i32>} : memref<16x256xf32, #tpu.memory_space<vmem>>, vector<16x128xf32>,
    %c0_23 = arith.constant 0 : index
    %c0_24 = arith.constant 0 : index
    %30 = vector.load %arg9[%c0_23, %c0_24] : memref<128x128xbf16, #tpu.memory_space<vmem>>, vector<128x128xbf16>
    %cst_25 = arith.constant dense<0.000000e+00> : vector<16x128xf32>
    %31 = tpu.matmul %13, %30, %cst_25 {dimension_numbers = #tpu.dot_dimension_numbers<[1], [0], [0], [1], [0, 0, 1, 1], [], []>} : vector<16x128xbf16>, vector<128x128xbf16>, vector<16x128xf32> -> vector<16x128xf32>
    %c0_26 = arith.constant 0 : index
    %c0_27 = arith.constant 0 : index
    %32 = vector.load %arg10[%c0_26, %c0_27] : memref<1x128xf32, #tpu.memory_space<vmem>>, vector<1x128xf32>
    %33 = vector.broadcast %32 : vector<1x128xf32> to vector<16x128xf32>
    %34 = arith.addf %31, %33 : vector<16x128xf32>
    %c0_28 = arith.constant 0 : index
    %c128 = arith.constant 128 : index
    %35 = vector.load %arg11[%c0_28, %c128] : memref<16x256xf32, #tpu.memory_space<vmem>>, vector<16x128xf32>
    tpu.vector_store %arg11[%c0_28, %c128], %34 {strides = array<i32>} : memref<16x256xf32, #tpu.memory_space<vmem>>, vector<16x128xf32>,
    return
  }
  func.func @transform_0(%arg0: i32, %arg1: memref<1xi32, #tpu.memory_space<smem>>) -> (i32, i32) {
    %c0_i32 = arith.constant 0 : i32
    %c0_i32_0 = arith.constant 0 : i32
    return %arg0, %c0_i32 : i32, i32
  }
  func.func @transform_1(%arg0: i32, %arg1: memref<1xi32, #tpu.memory_space<smem>>) -> (i32, i32, i32) {
    %c0 = arith.constant 0 : index
    %0 = memref.load %arg1[%c0] : memref<1xi32, #tpu.memory_space<smem>>
    %c0_i32 = arith.constant 0 : i32
    %c0_i32_0 = arith.constant 0 : i32
    %c0_i32_1 = arith.constant 0 : i32
    return %0, %c0_i32, %c0_i32_0 : i32, i32, i32
  }
  func.func @transform_2(%arg0: i32, %arg1: memref<1xi32, #tpu.memory_space<smem>>) -> (i32, i32, i32) {
    %c0 = arith.constant 0 : index
    %0 = memref.load %arg1[%c0] : memref<1xi32, #tpu.memory_space<smem>>
    %c0_i32 = arith.constant 0 : i32
    %c0_i32_0 = arith.constant 0 : i32
    %c0_i32_1 = arith.constant 0 : i32
    return %0, %c0_i32, %c0_i32_0 : i32, i32, i32
  }
  func.func @transform_3(%arg0: i32, %arg1: memref<1xi32, #tpu.memory_space<smem>>) -> (i32, i32, i32) {
    %c0 = arith.constant 0 : index
    %0 = memref.load %arg1[%c0] : memref<1xi32, #tpu.memory_space<smem>>
    %c0_i32 = arith.constant 0 : i32
    %c0_i32_0 = arith.constant 0 : i32
    %c0_i32_1 = arith.constant 0 : i32
    return %0, %c0_i32, %c0_i32_0 : i32, i32, i32
  }
  func.func @transform_4(%arg0: i32, %arg1: memref<1xi32, #tpu.memory_space<smem>>) -> (i32, i32, i32) {
    %c0 = arith.constant 0 : index
    %0 = memref.load %arg1[%c0] : memref<1xi32, #tpu.memory_space<smem>>
    %c0_i32 = arith.constant 0 : i32
    %c0_i32_0 = arith.constant 0 : i32
    %c0_i32_1 = arith.constant 0 : i32
    return %0, %c0_i32, %c0_i32_0 : i32, i32, i32
  }
  func.func @transform_5(%arg0: i32, %arg1: memref<1xi32, #tpu.memory_space<smem>>) -> (i32, i32) {
    %c0_i32 = arith.constant 0 : i32
    %c0_i32_0 = arith.constant 0 : i32
    %c0_i32_1 = arith.constant 0 : i32
    return %c0_i32, %c0_i32_0 : i32, i32
  }
  func.func @transform_6(%arg0: i32, %arg1: memref<1xi32, #tpu.memory_space<smem>>) -> (i32, i32) {
    %c0_i32 = arith.constant 0 : i32
    %c0_i32_0 = arith.constant 0 : i32
    %c0_i32_1 = arith.constant 0 : i32
    return %c0_i32, %c0_i32_0 : i32, i32
  }
  func.func @transform_7(%arg0: i32, %arg1: memref<1xi32, #tpu.memory_space<smem>>) -> (i32, i32) {
    %c0_i32 = arith.constant 0 : i32
    %c0_i32_0 = arith.constant 0 : i32
    %c0_i32_1 = arith.constant 0 : i32
    return %c0_i32, %c0_i32_0 : i32, i32
  }
  func.func @transform_8(%arg0: i32, %arg1: memref<1xi32, #tpu.memory_space<smem>>) -> (i32, i32) {
    %c0_i32 = arith.constant 0 : i32
    %c0_i32_0 = arith.constant 0 : i32
    %c0_i32_1 = arith.constant 0 : i32
    return %c0_i32, %c0_i32_0 : i32, i32
  }
  func.func @transform_9(%arg0: i32, %arg1: memref<1xi32, #tpu.memory_space<smem>>) -> (i32, i32) {
    %c0_i32 = arith.constant 0 : i32
    %c0_i32_0 = arith.constant 0 : i32
    return %arg0, %c0_i32 : i32, i32
  }
}

</mosaic_0001>

<llo_original>
// kernel: _forward_padded.1
$region0: #{_forward_padded.1}
  #allocation0 [shape = 'u32[]', space=smem, size = 0x4, offset = 0x4, fixed_abs, tag = 'smem constant byte address 0x4 - core index']
  #allocation1 [shape = 'u32[144,128]{1,0:T(1,128)}', space=vmem, size = 0x12000, scoped, tag = 'internal scratch']
  #allocation2 [shape = 's32[1]{0}', space=sflag, size = 0x4, scoped, tag = 'scoped memory for _forward_padded.1']
  #allocation3 [shape = 's32[1]{0:T(128)S(6)}', space=smem, size = 0x200, scoped, tag = 'prefetched SMEM operand 0']
  %s0 = inlined_call_operand.<no memory space> [shape: s32[1], index: 0, kind: input, shape index: {}]
  %s1 = inlined_call_operand.hbm [shape: bf16[16,768], index: 1, kind: input, shape index: {}]
  %s2 = inlined_call_operand.hbm [shape: bf16[2,768,384], index: 2, kind: input, shape index: {}]
  %s3 = inlined_call_operand.hbm [shape: f32[2,1,384], index: 3, kind: input, shape index: {}]
  %s4 = inlined_call_operand.hbm [shape: bf16[2,256,128], index: 4, kind: input, shape index: {}]
  %s5 = inlined_call_operand.hbm [shape: f32[2,1,128], index: 5, kind: input, shape index: {}]
  %s6 = inlined_call_operand.hbm [shape: bf16[128,128], index: 6, kind: input, shape index: {}]
  %s7 = inlined_call_operand.vmem [shape: f32[1,128], index: 7, kind: input, shape index: {}, may-alias: {7,9}]
  %s8 = inlined_call_operand.hbm [shape: bf16[128,128], index: 8, kind: input, shape index: {}]
  %s9 = inlined_call_operand.vmem [shape: f32[1,128], index: 9, kind: input, shape index: {}, may-alias: {7,9}]
  %s10 = inlined_call_operand.hbm [shape: f32[16,256], index: 10, kind: output, shape index: {}]
  %s11 = sld [smem:[#allocation0]]
  $region74: #{_forward_padded.1} parent=0
    _
  %s13 = ssub.s32 1, %s11
  %s14 = scalar_select 0, %s13, %s11
  %15 = sst [smem:[#allocation3]] %s0
  $region1: #{_forward_padded.1} parent=0
    #allocation4 [shape = 'u8[24576]{0}', space=vmem, size = 0x6000, scoped, tag = 'input window, operand 1, single buffered']
    #allocation5 [shape = 's32[1]{0}', space=sflag, size = 0x4, scoped, tag = 'scoped memory for _forward_padded.1']
    #allocation6 [shape = 's32[1]{0}', space=sflag, size = 0x4, scoped, tag = 'scoped memory for _forward_padded.1']
    #allocation7 [shape = 'u8[589824]{0}', space=vmem, size = 0x90000, scoped, tag = 'input window, operand 2, single buffered']
    #allocation8 [shape = 's32[1]{0}', space=sflag, size = 0x4, scoped, tag = 'scoped memory for _forward_padded.1']
    #allocation9 [shape = 'u8[1536]{0}', space=vmem, size = 0x800, scoped, tag = 'input window, operand 3, single buffered']
    #allocation10 [shape = 'u8[65536]{0}', space=vmem, size = 0x10000, scoped, tag = 'input window, operand 4, single buffered']
    #allocation11 [shape = 's32[1]{0}', space=sflag, size = 0x4, scoped, tag = 'scoped memory for _forward_padded.1']
    #allocation12 [shape = 'u8[512]{0}', space=vmem, size = 0x400, scoped, tag = 'input window, operand 5, single buffered']
    #allocation13 [shape = 'u8[32768]{0}', space=vmem, size = 0x8000, scoped, tag = 'input window, operand 6, single buffered']
    #allocation14 [shape = 's32[1]{0}', space=sflag, size = 0x4, scoped, tag = 'scoped memory for _forward_padded.1']
    #allocation15 [shape = 'u8[32768]{0}', space=vmem, size = 0x8000, scoped, tag = 'input window, operand 8, single buffered']
    #allocation16 [shape = 'u8[16384]{0}', space=vmem, size = 0x4000, scoped, tag = 'output window, operand 0, single buffered']
    %16 = vsyncpa [#allocation5], 0
    %17 = vsyncpa [#allocation8], 0
    %18 = vsyncpa [#allocation11], 0
    %19 = vsyncpa [#allocation14], 0
    %20 = vsyncpa [#allocation6], 0
    // Predicated region
    $region2: #{_forward_padded.1} parent=1 // pred_check
      _
    $region3: #{_forward_padded.1} parent=1 // pred_check_branch
      %22 = sbr.rel (0) target = $region5
    $region4: #{_forward_padded.1} parent=1 // pred_region
      %s24 = ssub.s32 768, 768
      %25 = vsyncadd [#allocation5], %s24
      %s26 = sshll.u32 [#allocation4], 4
      %s27 = int_to_ptr.vmem [resolvable:$true] %s26
      %32 = dma.hbm_to_vmem [thread:$0]  %s1, 768, %s27, [#allocation5], 384, 384, 24
    $region5: #{_forward_padded.1} parent=1 // pred_fallthru
      _
    // Predicated region
    $region6: #{_forward_padded.1} parent=1 // pred_check
      _
    $region7: #{_forward_padded.1} parent=1 // pred_check_branch
      %34 = sbr.rel (0) target = $region9
    $region8: #{_forward_padded.1} parent=1 // pred_region
      %s35 = sld [smem:[#allocation3]]
      %s37 = ssub.s32 18432, 18432
      %38 = vsyncadd [#allocation8], %s37
      %s39 = smul.addr %s35, 288
      %s40 = smul.addr %s39, 64
      %s41 = scalar_lea.hbm %s2, %s40
      %s42 = sshll.u32 [#allocation7], 4
      %s43 = int_to_ptr.vmem [resolvable:$true] %s42
      %48 = dma.hbm_to_vmem [thread:$0]  %s41, 18432, %s43, [#allocation8], 192, 192, 12
    $region9: #{_forward_padded.1} parent=1 // pred_fallthru
      _
    // Predicated region
    $region10: #{_forward_padded.1} parent=1 // pred_check
      _
    $region11: #{_forward_padded.1} parent=1 // pred_check_branch
      %50 = sbr.rel (0) target = $region13
    $region12: #{_forward_padded.1} parent=1 // pred_region
      %s51 = sld [smem:[#allocation3]]
      %s53 = ssub.s32 48, 48
      %54 = vsyncadd [#allocation8], %s53
      %s55 = smul.addr %s51, 3
      %s56 = smul.addr %s55, 16
      %s57 = scalar_lea.hbm %s3, %s56
      %s59 = sshll.u32 [#allocation9], 4
      %s60 = int_to_ptr.vmem [resolvable:$true] %s59
      %62 = dma.hbm_to_vmem [thread:$0]  %s57, 48, %s60, [#allocation8]
    $region13: #{_forward_padded.1} parent=1 // pred_fallthru
      _
    // Predicated region
    $region14: #{_forward_padded.1} parent=1 // pred_check
      _
    $region15: #{_forward_padded.1} parent=1 // pred_check_branch
      %64 = sbr.rel (0) target = $region17
    $region16: #{_forward_padded.1} parent=1 // pred_region
      %s65 = sld [smem:[#allocation3]]
      %s67 = ssub.s32 2048, 2048
      %68 = vsyncadd [#allocation11], %s67
      %s69 = smul.addr %s65, 32
      %s70 = smul.addr %s69, 64
      %s71 = scalar_lea.hbm %s4, %s70
      %s72 = sshll.u32 [#allocation10], 4
      %s73 = int_to_ptr.vmem [resolvable:$true] %s72
      %78 = dma.hbm_to_vmem [thread:$0]  %s71, 2048, %s73, [#allocation11], 64, 64, 4
    $region17: #{_forward_padded.1} parent=1 // pred_fallthru
      _
    // Predicated region
    $region18: #{_forward_padded.1} parent=1 // pred_check
      _
    $region19: #{_forward_padded.1} parent=1 // pred_check_branch
      %80 = sbr.rel (0) target = $region21
    $region20: #{_forward_padded.1} parent=1 // pred_region
      %s81 = sld [smem:[#allocation3]]
      %s83 = ssub.s32 16, 16
      %84 = vsyncadd [#allocation11], %s83
      %s85 = smul.addr %s81, 16
      %s86 = scalar_lea.hbm %s5, %s85
      %s88 = sshll.u32 [#allocation12], 4
      %s89 = int_to_ptr.vmem [resolvable:$true] %s88
      %91 = dma.hbm_to_vmem [thread:$0]  %s86, 16, %s89, [#allocation11]
    $region21: #{_forward_padded.1} parent=1 // pred_fallthru
      _
    // Predicated region
    $region22: #{_forward_padded.1} parent=1 // pred_check
      _
    $region23: #{_forward_padded.1} parent=1 // pred_check_branch
      %93 = sbr.rel (0) target = $region25
    $region24: #{_forward_padded.1} parent=1 // pred_region
      %s95 = ssub.s32 1024, 1024
      %96 = vsyncadd [#allocation14], %s95
      %s97 = sshll.u32 [#allocation13], 4
      %s98 = int_to_ptr.vmem [resolvable:$true] %s97
      %103 = dma.hbm_to_vmem [thread:$0]  %s6, 1024, %s98, [#allocation14], 64, 64, 4
    $region25: #{_forward_padded.1} parent=1 // pred_fallthru
      _
    // Predicated region
    $region26: #{_forward_padded.1} parent=1 // pred_check
      _
    $region27: #{_forward_padded.1} parent=1 // pred_check_branch
      %105 = sbr.rel (0) target = $region29
    $region28: #{_forward_padded.1} parent=1 // pred_region
      _
    $region29: #{_forward_padded.1} parent=1 // pred_fallthru
      _
    // Predicated region
    $region30: #{_forward_padded.1} parent=1 // pred_check
      _
    $region31: #{_forward_padded.1} parent=1 // pred_check_branch
      %107 = sbr.rel (0) target = $region33
    $region32: #{_forward_padded.1} parent=1 // pred_region
      %s109 = ssub.s32 1024, 1024
      %110 = vsyncadd [#allocation14], %s109
      %s111 = sshll.u32 [#allocation15], 4
      %s112 = int_to_ptr.vmem [resolvable:$true] %s111
      %117 = dma.hbm_to_vmem [thread:$0]  %s8, 1024, %s112, [#allocation14], 64, 64, 4
    $region33: #{_forward_padded.1} parent=1 // pred_fallthru
      _
    // Predicated region
    $region34: #{_forward_padded.1} parent=1 // pred_check
      _
    $region35: #{_forward_padded.1} parent=1 // pred_check_branch
      %119 = sbr.rel (0) target = $region37
    $region36: #{_forward_padded.1} parent=1 // pred_region
      _
    $region37: #{_forward_padded.1} parent=1 // pred_fallthru
      _
    // Predicated region
    $region38: #{_forward_padded.1} parent=1 // pred_check
      _
    $region39: #{_forward_padded.1} parent=1 // pred_check_branch
      %121 = sbr.rel (0) target = $region41
    $region40: #{_forward_padded.1} parent=1 // pred_region
      %122 = dma.done [#allocation5], 768
    $region41: #{_forward_padded.1} parent=1 // pred_fallthru
      _
    // Predicated region
    $region42: #{_forward_padded.1} parent=1 // pred_check
      _
    $region43: #{_forward_padded.1} parent=1 // pred_check_branch
      %124 = sbr.rel (0) target = $region45
    $region44: #{_forward_padded.1} parent=1 // pred_region
      %125 = dma.done [#allocation8], 18432
    $region45: #{_forward_padded.1} parent=1 // pred_fallthru
      _
    // Predicated region
    $region46: #{_forward_padded.1} parent=1 // pred_check
      _
    $region47: #{_forward_padded.1} parent=1 // pred_check_branch
      %127 = sbr.rel (0) target = $region49
    $region48: #{_forward_padded.1} parent=1 // pred_region
      %128 = dma.done [#allocation8], 48
    $region49: #{_forward_padded.1} parent=1 // pred_fallthru
      _
    // Predicated region
    $region50: #{_forward_padded.1} parent=1 // pred_check
      _
    $region51: #{_forward_padded.1} parent=1 // pred_check_branch
      %130 = sbr.rel (0) target = $region53
    $region52: #{_forward_padded.1} parent=1 // pred_region
      %131 = dma.done [#allocation11], 2048
    $region53: #{_forward_padded.1} parent=1 // pred_fallthru
      _
    // Predicated region
    $region54: #{_forward_padded.1} parent=1 // pred_check
      _
    $region55: #{_forward_padded.1} parent=1 // pred_check_branch
      %133 = sbr.rel (0) target = $region57
    $region56: #{_forward_padded.1} parent=1 // pred_region
      %134 = dma.done [#allocation11], 16
    $region57: #{_forward_padded.1} parent=1 // pred_fallthru
      _
    // Predicated region
    $region58: #{_forward_padded.1} parent=1 // pred_check
      _
    $region59: #{_forward_padded.1} parent=1 // pred_check_branch
      %136 = sbr.rel (0) target = $region61
    $region60: #{_forward_padded.1} parent=1 // pred_region
      %137 = dma.done [#allocation14], 1024
    $region61: #{_forward_padded.1} parent=1 // pred_fallthru
      _
    // Predicated region
    $region62: #{_forward_padded.1} parent=1 // pred_check
      _
    $region63: #{_forward_padded.1} parent=1 // pred_check_branch
      %139 = sbr.rel (0) target = $region65
    $region64: #{_forward_padded.1} parent=1 // pred_region
      %140 = dma.done [#allocation14], 1024
    $region65: #{_forward_padded.1} parent=1 // pred_fallthru
      _
    %s141 = sld [smem:[#allocation3]]
    %s142 = sld [smem:[#allocation3]]
    %s143 = sld [smem:[#allocation3]]
    %s144 = sld [smem:[#allocation3]]
    %v146 = vld [vmem:[#allocation4] sm:$0xff]
    %v147 = vld [vmem:[#allocation4 + $0x8] sm:$0xff]
    %v148 = vld [vmem:[#allocation4 + $0x10] sm:$0xff]
    %v149 = vld [vmem:[#allocation4 + $0x18] sm:$0xff]
    %v150 = vld [vmem:[#allocation4 + $0x20] sm:$0xff]
    %v151 = vld [vmem:[#allocation4 + $0x28] sm:$0xff]
    %v152 = vld [vmem:[#allocation7] sm:$0xff]
    %v153 = vld [vmem:[#allocation7 + $0x8] sm:$0xf]
    %v154 = vld [vmem:[#allocation7 + $0xc] sm:$0xff]
    %v155 = vld [vmem:[#allocation7 + $0x14] sm:$0xf]
    %v156 = vld [vmem:[#allocation7 + $0x18] sm:$0xff]
    %v157 = vld [vmem:[#allocation7 + $0x20] sm:$0xf]
    %v158 = vld [vmem:[#allocation7 + $0x24] sm:$0xff]
    %v159 = vld [vmem:[#allocation7 + $0x2c] sm:$0xf]
    %v160 = vld [vmem:[#allocation7 + $0x30] sm:$0xff]
    %v161 = vld [vmem:[#allocation7 + $0x38] sm:$0xf]
    %v162 = vld [vmem:[#allocation7 + $0x3c] sm:$0xff]
    %v163 = vld [vmem:[#allocation7 + $0x44] sm:$0xf]
    %v164 = vld [vmem:[#allocation7 + $0x48] sm:$0xff]
    %v165 = vld [vmem:[#allocation7 + $0x50] sm:$0xf]
    %v166 = vld [vmem:[#allocation7 + $0x54] sm:$0xff]
    %v167 = vld [vmem:[#allocation7 + $0x5c] sm:$0xf]
    %v168 = vld [vmem:[#allocation7 + $0x60] sm:$0xff]
    %v169 = vld [vmem:[#allocation7 + $0x68] sm:$0xf]
    %v170 = vld [vmem:[#allocation7 + $0x6c] sm:$0xff]
    %v171 = vld [vmem:[#allocation7 + $0x74] sm:$0xf]
    %v172 = vld [vmem:[#allocation7 + $0x78] sm:$0xff]
    %v173 = vld [vmem:[#allocation7 + $0x80] sm:$0xf]
    %v174 = vld [vmem:[#allocation7 + $0x84] sm:$0xff]
    %v175 = vld [vmem:[#allocation7 + $0x8c] sm:$0xf]
    %v176 = vld [vmem:[#allocation7 + $0x90] sm:$0xff]
    %v177 = vld [vmem:[#allocation7 + $0x98] sm:$0xf]
    %v178 = vld [vmem:[#allocation7 + $0x9c] sm:$0xff]
    %v179 = vld [vmem:[#allocation7 + $0xa4] sm:$0xf]
    %v180 = vld [vmem:[#allocation7 + $0xa8] sm:$0xff]
    %v181 = vld [vmem:[#allocation7 + $0xb0] sm:$0xf]
    %v182 = vld [vmem:[#allocation7 + $0xb4] sm:$0xff]
    %v183 = vld [vmem:[#allocation7 + $0xbc] sm:$0xf]
    %v184 = vld [vmem:[#allocation7 + $0xc0] sm:$0xff]
    %v185 = vld [vmem:[#allocation7 + $0xc8] sm:$0xf]
    %v186 = vld [vmem:[#allocation7 + $0xcc] sm:$0xff]
    %v187 = vld [vmem:[#allocation7 + $0xd4] sm:$0xf]
    %v188 = vld [vmem:[#allocation7 + $0xd8] sm:$0xff]
    %v189 = vld [vmem:[#allocation7 + $0xe0] sm:$0xf]
    %v190 = vld [vmem:[#allocation7 + $0xe4] sm:$0xff]
    %v191 = vld [vmem:[#allocation7 + $0xec] sm:$0xf]
    %v192 = vld [vmem:[#allocation7 + $0xf0] sm:$0xff]
    %v193 = vld [vmem:[#allocation7 + $0xf8] sm:$0xf]
    %v194 = vld [vmem:[#allocation7 + $0xfc] sm:$0xff]
    %v195 = vld [vmem:[#allocation7 + $0x104] sm:$0xf]
    %v196 = vld [vmem:[#allocation7 + $0x108] sm:$0xff]
    %v197 = vld [vmem:[#allocation7 + $0x110] sm:$0xf]
    %v198 = vld [vmem:[#allocation7 + $0x114] sm:$0xff]
    %v199 = vld [vmem:[#allocation7 + $0x11c] sm:$0xf]
    %v200 = vld [vmem:[#allocation7 + $0x120] sm:$0xff]
    %v201 = vld [vmem:[#allocation7 + $0x128] sm:$0xf]
    %v202 = vld [vmem:[#allocation7 + $0x12c] sm:$0xff]
    %v203 = vld [vmem:[#allocation7 + $0x134] sm:$0xf]
    %v204 = vld [vmem:[#allocation7 + $0x138] sm:$0xff]
    %v205 = vld [vmem:[#allocation7 + $0x140] sm:$0xf]
    %v206 = vld [vmem:[#allocation7 + $0x144] sm:$0xff]
    %v207 = vld [vmem:[#allocation7 + $0x14c] sm:$0xf]
    %v208 = vld [vmem:[#allocation7 + $0x150] sm:$0xff]
    %v209 = vld [vmem:[#allocation7 + $0x158] sm:$0xf]
    %v210 = vld [vmem:[#allocation7 + $0x15c] sm:$0xff]
    %v211 = vld [vmem:[#allocation7 + $0x164] sm:$0xf]
    %v212 = vld [vmem:[#allocation7 + $0x168] sm:$0xff]
    %v213 = vld [vmem:[#allocation7 + $0x170] sm:$0xf]
    %v214 = vld [vmem:[#allocation7 + $0x174] sm:$0xff]
    %v215 = vld [vmem:[#allocation7 + $0x17c] sm:$0xf]
    %v216 = vld [vmem:[#allocation7 + $0x180] sm:$0xff]
    %v217 = vld [vmem:[#allocation7 + $0x188] sm:$0xf]
    %v218 = vld [vmem:[#allocation7 + $0x18c] sm:$0xff]
    %v219 = vld [vmem:[#allocation7 + $0x194] sm:$0xf]
    %v220 = vld [vmem:[#allocation7 + $0x198] sm:$0xff]
    %v221 = vld [vmem:[#allocation7 + $0x1a0] sm:$0xf]
    %v222 = vld [vmem:[#allocation7 + $0x1a4] sm:$0xff]
    %v223 = vld [vmem:[#allocation7 + $0x1ac] sm:$0xf]
    %v224 = vld [vmem:[#allocation7 + $0x1b0] sm:$0xff]
    %v225 = vld [vmem:[#allocation7 + $0x1b8] sm:$0xf]
    %v226 = vld [vmem:[#allocation7 + $0x1bc] sm:$0xff]
    %v227 = vld [vmem:[#allocation7 + $0x1c4] sm:$0xf]
    %v228 = vld [vmem:[#allocation7 + $0x1c8] sm:$0xff]
    %v229 = vld [vmem:[#allocation7 + $0x1d0] sm:$0xf]
    %v230 = vld [vmem:[#allocation7 + $0x1d4] sm:$0xff]
    %v231 = vld [vmem:[#allocation7 + $0x1dc] sm:$0xf]
    %v232 = vld [vmem:[#allocation7 + $0x1e0] sm:$0xff]
    %v233 = vld [vmem:[#allocation7 + $0x1e8] sm:$0xf]
    %v234 = vld [vmem:[#allocation7 + $0x1ec] sm:$0xff]
    %v235 = vld [vmem:[#allocation7 + $0x1f4] sm:$0xf]
    %v236 = vld [vmem:[#allocation7 + $0x1f8] sm:$0xff]
    %v237 = vld [vmem:[#allocation7 + $0x200] sm:$0xf]
    %v238 = vld [vmem:[#allocation7 + $0x204] sm:$0xff]
    %v239 = vld [vmem:[#allocation7 + $0x20c] sm:$0xf]
    %v240 = vld [vmem:[#allocation7 + $0x210] sm:$0xff]
    %v241 = vld [vmem:[#allocation7 + $0x218] sm:$0xf]
    %v242 = vld [vmem:[#allocation7 + $0x21c] sm:$0xff]
    %v243 = vld [vmem:[#allocation7 + $0x224] sm:$0xf]
    %v244 = vld [vmem:[#allocation7 + $0x228] sm:$0xff]
    %v245 = vld [vmem:[#allocation7 + $0x230] sm:$0xf]
    %v246 = vld [vmem:[#allocation7 + $0x234] sm:$0xff]
    %v247 = vld [vmem:[#allocation7 + $0x23c] sm:$0xf]
    %v248 = vld [vmem:[#allocation7 + $0x240] sm:$0xff]
    %v249 = vld [vmem:[#allocation7 + $0x248] sm:$0xf]
    %v250 = vld [vmem:[#allocation7 + $0x24c] sm:$0xff]
    %v251 = vld [vmem:[#allocation7 + $0x254] sm:$0xf]
    %v252 = vld [vmem:[#allocation7 + $0x258] sm:$0xff]
    %v253 = vld [vmem:[#allocation7 + $0x260] sm:$0xf]
    %v254 = vld [vmem:[#allocation7 + $0x264] sm:$0xff]
    %v255 = vld [vmem:[#allocation7 + $0x26c] sm:$0xf]
    %v256 = vld [vmem:[#allocation7 + $0x270] sm:$0xff]
    %v257 = vld [vmem:[#allocation7 + $0x278] sm:$0xf]
    %v258 = vld [vmem:[#allocation7 + $0x27c] sm:$0xff]
    %v259 = vld [vmem:[#allocation7 + $0x284] sm:$0xf]
    %v260 = vld [vmem:[#allocation7 + $0x288] sm:$0xff]
    %v261 = vld [vmem:[#allocation7 + $0x290] sm:$0xf]
    %v262 = vld [vmem:[#allocation7 + $0x294] sm:$0xff]
    %v263 = vld [vmem:[#allocation7 + $0x29c] sm:$0xf]
    %v264 = vld [vmem:[#allocation7 + $0x2a0] sm:$0xff]
    %v265 = vld [vmem:[#allocation7 + $0x2a8] sm:$0xf]
    %v266 = vld [vmem:[#allocation7 + $0x2ac] sm:$0xff]
    %v267 = vld [vmem:[#allocation7 + $0x2b4] sm:$0xf]
    %v268 = vld [vmem:[#allocation7 + $0x2b8] sm:$0xff]
    %v269 = vld [vmem:[#allocation7 + $0x2c0] sm:$0xf]
    %v270 = vld [vmem:[#allocation7 + $0x2c4] sm:$0xff]
    %v271 = vld [vmem:[#allocation7 + $0x2cc] sm:$0xf]
    %v272 = vld [vmem:[#allocation7 + $0x2d0] sm:$0xff]
    %v273 = vld [vmem:[#allocation7 + $0x2d8] sm:$0xf]
    %v274 = vld [vmem:[#allocation7 + $0x2dc] sm:$0xff]
    %v275 = vld [vmem:[#allocation7 + $0x2e4] sm:$0xf]
    %v276 = vld [vmem:[#allocation7 + $0x2e8] sm:$0xff]
    %v277 = vld [vmem:[#allocation7 + $0x2f0] sm:$0xf]
    %v278 = vld [vmem:[#allocation7 + $0x2f4] sm:$0xff]
    %v279 = vld [vmem:[#allocation7 + $0x2fc] sm:$0xf]
    %v280 = vld [vmem:[#allocation7 + $0x300] sm:$0xff]
    %v281 = vld [vmem:[#allocation7 + $0x308] sm:$0xf]
    %v282 = vld [vmem:[#allocation7 + $0x30c] sm:$0xff]
    %v283 = vld [vmem:[#allocation7 + $0x314] sm:$0xf]
    %v284 = vld [vmem:[#allocation7 + $0x318] sm:$0xff]
    %v285 = vld [vmem:[#allocation7 + $0x320] sm:$0xf]
    %v286 = vld [vmem:[#allocation7 + $0x324] sm:$0xff]
    %v287 = vld [vmem:[#allocation7 + $0x32c] sm:$0xf]
    %v288 = vld [vmem:[#allocation7 + $0x330] sm:$0xff]
    %v289 = vld [vmem:[#allocation7 + $0x338] sm:$0xf]
    %v290 = vld [vmem:[#allocation7 + $0x33c] sm:$0xff]
    %v291 = vld [vmem:[#allocation7 + $0x344] sm:$0xf]
    %v292 = vld [vmem:[#allocation7 + $0x348] sm:$0xff]
    %v293 = vld [vmem:[#allocation7 + $0x350] sm:$0xf]
    %v294 = vld [vmem:[#allocation7 + $0x354] sm:$0xff]
    %v295 = vld [vmem:[#allocation7 + $0x35c] sm:$0xf]
    %v296 = vld [vmem:[#allocation7 + $0x360] sm:$0xff]
    %v297 = vld [vmem:[#allocation7 + $0x368] sm:$0xf]
    %v298 = vld [vmem:[#allocation7 + $0x36c] sm:$0xff]
    %v299 = vld [vmem:[#allocation7 + $0x374] sm:$0xf]
    %v300 = vld [vmem:[#allocation7 + $0x378] sm:$0xff]
    %v301 = vld [vmem:[#allocation7 + $0x380] sm:$0xf]
    %v302 = vld [vmem:[#allocation7 + $0x384] sm:$0xff]
    %v303 = vld [vmem:[#allocation7 + $0x38c] sm:$0xf]
    %v304 = vld [vmem:[#allocation7 + $0x390] sm:$0xff]
    %v305 = vld [vmem:[#allocation7 + $0x398] sm:$0xf]
    %v306 = vld [vmem:[#allocation7 + $0x39c] sm:$0xff]
    %v307 = vld [vmem:[#allocation7 + $0x3a4] sm:$0xf]
    %v308 = vld [vmem:[#allocation7 + $0x3a8] sm:$0xff]
    %v309 = vld [vmem:[#allocation7 + $0x3b0] sm:$0xf]
    %v310 = vld [vmem:[#allocation7 + $0x3b4] sm:$0xff]
    %v311 = vld [vmem:[#allocation7 + $0x3bc] sm:$0xf]
    %v312 = vld [vmem:[#allocation7 + $0x3c0] sm:$0xff]
    %v313 = vld [vmem:[#allocation7 + $0x3c8] sm:$0xf]
    %v314 = vld [vmem:[#allocation7 + $0x3cc] sm:$0xff]
    %v315 = vld [vmem:[#allocation7 + $0x3d4] sm:$0xf]
    %v316 = vld [vmem:[#allocation7 + $0x3d8] sm:$0xff]
    %v317 = vld [vmem:[#allocation7 + $0x3e0] sm:$0xf]
    %v318 = vld [vmem:[#allocation7 + $0x3e4] sm:$0xff]
    %v319 = vld [vmem:[#allocation7 + $0x3ec] sm:$0xf]
    %v320 = vld [vmem:[#allocation7 + $0x3f0] sm:$0xff]
    %v321 = vld [vmem:[#allocation7 + $0x3f8] sm:$0xf]
    %v322 = vld [vmem:[#allocation7 + $0x3fc] sm:$0xff]
    %v323 = vld [vmem:[#allocation7 + $0x404] sm:$0xf]
    %v324 = vld [vmem:[#allocation7 + $0x408] sm:$0xff]
    %v325 = vld [vmem:[#allocation7 + $0x410] sm:$0xf]
    %v326 = vld [vmem:[#allocation7 + $0x414] sm:$0xff]
    %v327 = vld [vmem:[#allocation7 + $0x41c] sm:$0xf]
    %v328 = vld [vmem:[#allocation7 + $0x420] sm:$0xff]
    %v329 = vld [vmem:[#allocation7 + $0x428] sm:$0xf]
    %v330 = vld [vmem:[#allocation7 + $0x42c] sm:$0xff]
    %v331 = vld [vmem:[#allocation7 + $0x434] sm:$0xf]
    %v332 = vld [vmem:[#allocation7 + $0x438] sm:$0xff]
    %v333 = vld [vmem:[#allocation7 + $0x440] sm:$0xf]
    %v334 = vld [vmem:[#allocation7 + $0x444] sm:$0xff]
    %v335 = vld [vmem:[#allocation7 + $0x44c] sm:$0xf]
    %v336 = vld [vmem:[#allocation7 + $0x450] sm:$0xff]
    %v337 = vld [vmem:[#allocation7 + $0x458] sm:$0xf]
    %v338 = vld [vmem:[#allocation7 + $0x45c] sm:$0xff]
    %v339 = vld [vmem:[#allocation7 + $0x464] sm:$0xf]
    %v340 = vld [vmem:[#allocation7 + $0x468] sm:$0xff]
    %v341 = vld [vmem:[#allocation7 + $0x470] sm:$0xf]
    %v342 = vld [vmem:[#allocation7 + $0x474] sm:$0xff]
    %v343 = vld [vmem:[#allocation7 + $0x47c] sm:$0xf]
    %v344 = vld [vmem:[#allocation9] sm:$0x7]
    %v346 = vlaneseq
    %v347 = vshrl.u32 %v346, 7
    %v348 = vsub.s32 0, %v347
    %v349 = vrot.slane %v344, %v348
    %v350 = vlaneseq
    %v351 = vshrl.u32 %v350, 7
    %v352 = vsub.s32 1, %v351
    %v353 = vrot.slane %v344, %v352
    %v354 = vlaneseq
    %v355 = vshrl.u32 %v354, 7
    %v356 = vsub.s32 2, %v355
    %v357 = vrot.slane %v344, %v356
    %v367 = vunpack.c.l.b16 %v146
    %v368 = vunpack.c.h.b16 %v146
    %v369 = vunpack.c.l.b16 %v147
    %v370 = vunpack.c.h.b16 %v147
    %v371 = vunpack.c.l.b16 %v148
    %v372 = vunpack.c.h.b16 %v148
    %v373 = vunpack.c.l.b16 %v149
    %v374 = vunpack.c.h.b16 %v149
    %v375 = vunpack.c.l.b16 %v150
    %v376 = vunpack.c.h.b16 %v150
    %v377 = vunpack.c.l.b16 %v151
    %v378 = vunpack.c.h.b16 %v151
    %v379 = vpack.c.b16 %v373, %v367
    %v380 = vpack.c.b16 %v374, %v368
    %v381 = vpack.c.b16 %v375, %v369
    %v382 = vpack.c.b16 %v376, %v370
    %v383 = vpack.c.b16 %v377, %v371
    %v384 = vpack.c.b16 %v378, %v372
    %v583 = vunpack.c.l.b16 %v152
    %v584 = vunpack.c.h.b16 %v152
    %v585 = vunpack.c.l.b16 %v153
    %v586 = vunpack.c.l.b16 %v154
    %v587 = vunpack.c.h.b16 %v154
    %v588 = vunpack.c.l.b16 %v155
    %v589 = vunpack.c.l.b16 %v156
    %v590 = vunpack.c.h.b16 %v156
    %v591 = vunpack.c.l.b16 %v157
    %v592 = vunpack.c.l.b16 %v158
    %v593 = vunpack.c.h.b16 %v158
    %v594 = vunpack.c.l.b16 %v159
    %v595 = vunpack.c.l.b16 %v160
    %v596 = vunpack.c.h.b16 %v160
    %v597 = vunpack.c.l.b16 %v161
    %v598 = vunpack.c.l.b16 %v162
    %v599 = vunpack.c.h.b16 %v162
    %v600 = vunpack.c.l.b16 %v163
    %v601 = vunpack.c.l.b16 %v164
    %v602 = vunpack.c.h.b16 %v164
    %v603 = vunpack.c.l.b16 %v165
    %v604 = vunpack.c.l.b16 %v166
    %v605 = vunpack.c.h.b16 %v166
    %v606 = vunpack.c.l.b16 %v167
    %v607 = vunpack.c.l.b16 %v168
    %v608 = vunpack.c.h.b16 %v168
    %v609 = vunpack.c.l.b16 %v169
    %v610 = vunpack.c.l.b16 %v170
    %v611 = vunpack.c.h.b16 %v170
    %v612 = vunpack.c.l.b16 %v171
    %v613 = vunpack.c.l.b16 %v172
    %v614 = vunpack.c.h.b16 %v172
    %v615 = vunpack.c.l.b16 %v173
    %v616 = vunpack.c.l.b16 %v174
    %v617 = vunpack.c.h.b16 %v174
    %v618 = vunpack.c.l.b16 %v175
    %v619 = vunpack.c.l.b16 %v176
    %v620 = vunpack.c.h.b16 %v176
    %v621 = vunpack.c.l.b16 %v177
    %v622 = vunpack.c.l.b16 %v178
    %v623 = vunpack.c.h.b16 %v178
    %v624 = vunpack.c.l.b16 %v179
    %v625 = vunpack.c.l.b16 %v180
    %v626 = vunpack.c.h.b16 %v180
    %v627 = vunpack.c.l.b16 %v181
    %v628 = vunpack.c.l.b16 %v182
    %v629 = vunpack.c.h.b16 %v182
    %v630 = vunpack.c.l.b16 %v183
    %v631 = vunpack.c.l.b16 %v184
    %v632 = vunpack.c.h.b16 %v184
    %v633 = vunpack.c.l.b16 %v185
    %v634 = vunpack.c.l.b16 %v186
    %v635 = vunpack.c.h.b16 %v186
    %v636 = vunpack.c.l.b16 %v187
    %v637 = vunpack.c.l.b16 %v188
    %v638 = vunpack.c.h.b16 %v188
    %v639 = vunpack.c.l.b16 %v189
    %v640 = vunpack.c.l.b16 %v190
    %v641 = vunpack.c.h.b16 %v190
    %v642 = vunpack.c.l.b16 %v191
    %v643 = vunpack.c.l.b16 %v192
    %v644 = vunpack.c.h.b16 %v192
    %v645 = vunpack.c.l.b16 %v193
    %v646 = vunpack.c.l.b16 %v194
    %v647 = vunpack.c.h.b16 %v194
    %v648 = vunpack.c.l.b16 %v195
    %v649 = vunpack.c.l.b16 %v196
    %v650 = vunpack.c.h.b16 %v196
    %v651 = vunpack.c.l.b16 %v197
    %v652 = vunpack.c.l.b16 %v198
    %v653 = vunpack.c.h.b16 %v198
    %v654 = vunpack.c.l.b16 %v199
    %v655 = vunpack.c.l.b16 %v200
    %v656 = vunpack.c.h.b16 %v200
    %v657 = vunpack.c.l.b16 %v201
    %v658 = vunpack.c.l.b16 %v202
    %v659 = vunpack.c.h.b16 %v202
    %v660 = vunpack.c.l.b16 %v203
    %v661 = vunpack.c.l.b16 %v204
    %v662 = vunpack.c.h.b16 %v204
    %v663 = vunpack.c.l.b16 %v205
    %v664 = vunpack.c.l.b16 %v206
    %v665 = vunpack.c.h.b16 %v206
    %v666 = vunpack.c.l.b16 %v207
    %v667 = vunpack.c.l.b16 %v208
    %v668 = vunpack.c.h.b16 %v208
    %v669 = vunpack.c.l.b16 %v209
    %v670 = vunpack.c.l.b16 %v210
    %v671 = vunpack.c.h.b16 %v210
    %v672 = vunpack.c.l.b16 %v211
    %v673 = vunpack.c.l.b16 %v212
    %v674 = vunpack.c.h.b16 %v212
    %v675 = vunpack.c.l.b16 %v213
    %v676 = vunpack.c.l.b16 %v214
    %v677 = vunpack.c.h.b16 %v214
    %v678 = vunpack.c.l.b16 %v215
    %v679 = vunpack.c.l.b16 %v216
    %v680 = vunpack.c.h.b16 %v216
    %v681 = vunpack.c.l.b16 %v217
    %v682 = vunpack.c.l.b16 %v218
    %v683 = vunpack.c.h.b16 %v218
    %v684 = vunpack.c.l.b16 %v219
    %v685 = vunpack.c.l.b16 %v220
    %v686 = vunpack.c.h.b16 %v220
    %v687 = vunpack.c.l.b16 %v221
    %v688 = vunpack.c.l.b16 %v222
    %v689 = vunpack.c.h.b16 %v222
    %v690 = vunpack.c.l.b16 %v223
    %v691 = vunpack.c.l.b16 %v224
    %v692 = vunpack.c.h.b16 %v224
    %v693 = vunpack.c.l.b16 %v225
    %v694 = vunpack.c.l.b16 %v226
    %v695 = vunpack.c.h.b16 %v226
    %v696 = vunpack.c.l.b16 %v227
    %v697 = vunpack.c.l.b16 %v228
    %v698 = vunpack.c.h.b16 %v228
    %v699 = vunpack.c.l.b16 %v229
    %v700 = vunpack.c.l.b16 %v230
    %v701 = vunpack.c.h.b16 %v230
    %v702 = vunpack.c.l.b16 %v231
    %v703 = vunpack.c.l.b16 %v232
    %v704 = vunpack.c.h.b16 %v232
    %v705 = vunpack.c.l.b16 %v233
    %v706 = vunpack.c.l.b16 %v234
    %v707 = vunpack.c.h.b16 %v234
    %v708 = vunpack.c.l.b16 %v235
    %v709 = vunpack.c.l.b16 %v236
    %v710 = vunpack.c.h.b16 %v236
    %v711 = vunpack.c.l.b16 %v237
    %v712 = vunpack.c.l.b16 %v238
    %v713 = vunpack.c.h.b16 %v238
    %v714 = vunpack.c.l.b16 %v239
    %v715 = vunpack.c.l.b16 %v240
    %v716 = vunpack.c.h.b16 %v240
    %v717 = vunpack.c.l.b16 %v241
    %v718 = vunpack.c.l.b16 %v242
    %v719 = vunpack.c.h.b16 %v242
    %v720 = vunpack.c.l.b16 %v243
    %v721 = vunpack.c.l.b16 %v244
    %v722 = vunpack.c.h.b16 %v244
    %v723 = vunpack.c.l.b16 %v245
    %v724 = vunpack.c.l.b16 %v246
    %v725 = vunpack.c.h.b16 %v246
    %v726 = vunpack.c.l.b16 %v247
    %v727 = vunpack.c.l.b16 %v248
    %v728 = vunpack.c.h.b16 %v248
    %v729 = vunpack.c.l.b16 %v249
    %v730 = vunpack.c.l.b16 %v250
    %v731 = vunpack.c.h.b16 %v250
    %v732 = vunpack.c.l.b16 %v251
    %v733 = vunpack.c.l.b16 %v252
    %v734 = vunpack.c.h.b16 %v252
    %v735 = vunpack.c.l.b16 %v253
    %v736 = vunpack.c.l.b16 %v254
    %v737 = vunpack.c.h.b16 %v254
    %v738 = vunpack.c.l.b16 %v255
    %v739 = vunpack.c.l.b16 %v256
    %v740 = vunpack.c.h.b16 %v256
    %v741 = vunpack.c.l.b16 %v257
    %v742 = vunpack.c.l.b16 %v258
    %v743 = vunpack.c.h.b16 %v258
    %v744 = vunpack.c.l.b16 %v259
    %v745 = vunpack.c.l.b16 %v260
    %v746 = vunpack.c.h.b16 %v260
    %v747 = vunpack.c.l.b16 %v261
    %v748 = vunpack.c.l.b16 %v262
    %v749 = vunpack.c.h.b16 %v262
    %v750 = vunpack.c.l.b16 %v263
    %v751 = vunpack.c.l.b16 %v264
    %v752 = vunpack.c.h.b16 %v264
    %v753 = vunpack.c.l.b16 %v265
    %v754 = vunpack.c.l.b16 %v266
    %v755 = vunpack.c.h.b16 %v266
    %v756 = vunpack.c.l.b16 %v267
    %v757 = vunpack.c.l.b16 %v268
    %v758 = vunpack.c.h.b16 %v268
    %v759 = vunpack.c.l.b16 %v269
    %v760 = vunpack.c.l.b16 %v270
    %v761 = vunpack.c.h.b16 %v270
    %v762 = vunpack.c.l.b16 %v271
    %v763 = vunpack.c.l.b16 %v272
    %v764 = vunpack.c.h.b16 %v272
    %v765 = vunpack.c.l.b16 %v273
    %v766 = vunpack.c.l.b16 %v274
    %v767 = vunpack.c.h.b16 %v274
    %v768 = vunpack.c.l.b16 %v275
    %v769 = vunpack.c.l.b16 %v276
    %v770 = vunpack.c.h.b16 %v276
    %v771 = vunpack.c.l.b16 %v277
    %v772 = vunpack.c.l.b16 %v278
    %v773 = vunpack.c.h.b16 %v278
    %v774 = vunpack.c.l.b16 %v279
    %v775 = vunpack.c.l.b16 %v280
    %v776 = vunpack.c.h.b16 %v280
    %v777 = vunpack.c.l.b16 %v281
    %v778 = vunpack.c.l.b16 %v282
    %v779 = vunpack.c.h.b16 %v282
    %v780 = vunpack.c.l.b16 %v283
    %v781 = vunpack.c.l.b16 %v284
    %v782 = vunpack.c.h.b16 %v284
    %v783 = vunpack.c.l.b16 %v285
    %v784 = vunpack.c.l.b16 %v286
    %v785 = vunpack.c.h.b16 %v286
    %v786 = vunpack.c.l.b16 %v287
    %v787 = vunpack.c.l.b16 %v288
    %v788 = vunpack.c.h.b16 %v288
    %v789 = vunpack.c.l.b16 %v289
    %v790 = vunpack.c.l.b16 %v290
    %v791 = vunpack.c.h.b16 %v290
    %v792 = vunpack.c.l.b16 %v291
    %v793 = vunpack.c.l.b16 %v292
    %v794 = vunpack.c.h.b16 %v292
    %v795 = vunpack.c.l.b16 %v293
    %v796 = vunpack.c.l.b16 %v294
    %v797 = vunpack.c.h.b16 %v294
    %v798 = vunpack.c.l.b16 %v295
    %v799 = vunpack.c.l.b16 %v296
    %v800 = vunpack.c.h.b16 %v296
    %v801 = vunpack.c.l.b16 %v297
    %v802 = vunpack.c.l.b16 %v298
    %v803 = vunpack.c.h.b16 %v298
    %v804 = vunpack.c.l.b16 %v299
    %v805 = vunpack.c.l.b16 %v300
    %v806 = vunpack.c.h.b16 %v300
    %v807 = vunpack.c.l.b16 %v301
    %v808 = vunpack.c.l.b16 %v302
    %v809 = vunpack.c.h.b16 %v302
    %v810 = vunpack.c.l.b16 %v303
    %v811 = vunpack.c.l.b16 %v304
    %v812 = vunpack.c.h.b16 %v304
    %v813 = vunpack.c.l.b16 %v305
    %v814 = vunpack.c.l.b16 %v306
    %v815 = vunpack.c.h.b16 %v306
    %v816 = vunpack.c.l.b16 %v307
    %v817 = vunpack.c.l.b16 %v308
    %v818 = vunpack.c.h.b16 %v308
    %v819 = vunpack.c.l.b16 %v309
    %v820 = vunpack.c.l.b16 %v310
    %v821 = vunpack.c.h.b16 %v310
    %v822 = vunpack.c.l.b16 %v311
    %v823 = vunpack.c.l.b16 %v312
    %v824 = vunpack.c.h.b16 %v312
    %v825 = vunpack.c.l.b16 %v313
    %v826 = vunpack.c.l.b16 %v314
    %v827 = vunpack.c.h.b16 %v314
    %v828 = vunpack.c.l.b16 %v315
    %v829 = vunpack.c.l.b16 %v316
    %v830 = vunpack.c.h.b16 %v316
    %v831 = vunpack.c.l.b16 %v317
    %v832 = vunpack.c.l.b16 %v318
    %v833 = vunpack.c.h.b16 %v318
    %v834 = vunpack.c.l.b16 %v319
    %v835 = vunpack.c.l.b16 %v320
    %v836 = vunpack.c.h.b16 %v320
    %v837 = vunpack.c.l.b16 %v321
    %v838 = vunpack.c.l.b16 %v322
    %v839 = vunpack.c.h.b16 %v322
    %v840 = vunpack.c.l.b16 %v323
    %v841 = vunpack.c.l.b16 %v324
    %v842 = vunpack.c.h.b16 %v324
    %v843 = vunpack.c.l.b16 %v325
    %v844 = vunpack.c.l.b16 %v326
    %v845 = vunpack.c.h.b16 %v326
    %v846 = vunpack.c.l.b16 %v327
    %v847 = vunpack.c.l.b16 %v328
    %v848 = vunpack.c.h.b16 %v328
    %v849 = vunpack.c.l.b16 %v329
    %v850 = vunpack.c.l.b16 %v330
    %v851 = vunpack.c.h.b16 %v330
    %v852 = vunpack.c.l.b16 %v331
    %v853 = vunpack.c.l.b16 %v332
    %v854 = vunpack.c.h.b16 %v332
    %v855 = vunpack.c.l.b16 %v333
    %v856 = vunpack.c.l.b16 %v334
    %v857 = vunpack.c.h.b16 %v334
    %v858 = vunpack.c.l.b16 %v335
    %v859 = vunpack.c.l.b16 %v336
    %v860 = vunpack.c.h.b16 %v336
    %v861 = vunpack.c.l.b16 %v337
    %v862 = vunpack.c.l.b16 %v338
    %v863 = vunpack.c.h.b16 %v338
    %v864 = vunpack.c.l.b16 %v339
    %v865 = vunpack.c.l.b16 %v340
    %v866 = vunpack.c.h.b16 %v340
    %v867 = vunpack.c.l.b16 %v341
    %v868 = vunpack.c.l.b16 %v342
    %v869 = vunpack.c.h.b16 %v342
    %v870 = vunpack.c.l.b16 %v343
    %v871 = vpack.c.b16 %v586, %v583
    %v872 = vpack.c.b16 %v587, %v584
    %v873 = vpack.c.b16 %v588, %v585
    %v874 = vpack.c.b16 %v592, %v589
    %v875 = vpack.c.b16 %v593, %v590
    %v876 = vpack.c.b16 %v594, %v591
    %v877 = vpack.c.b16 %v598, %v595
    %v878 = vpack.c.b16 %v599, %v596
    %v879 = vpack.c.b16 %v600, %v597
    %v880 = vpack.c.b16 %v604, %v601
    %v881 = vpack.c.b16 %v605, %v602
    %v882 = vpack.c.b16 %v606, %v603
    %v883 = vpack.c.b16 %v610, %v607
    %v884 = vpack.c.b16 %v611, %v608
    %v885 = vpack.c.b16 %v612, %v609
    %v886 = vpack.c.b16 %v616, %v613
    %v887 = vpack.c.b16 %v617, %v614
    %v888 = vpack.c.b16 %v618, %v615
    %v889 = vpack.c.b16 %v622, %v619
    %v890 = vpack.c.b16 %v623, %v620
    %v891 = vpack.c.b16 %v624, %v621
    %v892 = vpack.c.b16 %v628, %v625
    %v893 = vpack.c.b16 %v629, %v626
    %v894 = vpack.c.b16 %v630, %v627
    %v895 = vpack.c.b16 %v634, %v631
    %v896 = vpack.c.b16 %v635, %v632
    %v897 = vpack.c.b16 %v636, %v633
    %v898 = vpack.c.b16 %v640, %v637
    %v899 = vpack.c.b16 %v641, %v638
    %v900 = vpack.c.b16 %v642, %v639
    %v901 = vpack.c.b16 %v646, %v643
    %v902 = vpack.c.b16 %v647, %v644
    %v903 = vpack.c.b16 %v648, %v645
    %v904 = vpack.c.b16 %v652, %v649
    %v905 = vpack.c.b16 %v653, %v650
    %v906 = vpack.c.b16 %v654, %v651
    %v907 = vpack.c.b16 %v658, %v655
    %v908 = vpack.c.b16 %v659, %v656
    %v909 = vpack.c.b16 %v660, %v657
    %v910 = vpack.c.b16 %v664, %v661
    %v911 = vpack.c.b16 %v665, %v662
    %v912 = vpack.c.b16 %v666, %v663
    %v913 = vpack.c.b16 %v670, %v667
    %v914 = vpack.c.b16 %v671, %v668
    %v915 = vpack.c.b16 %v672, %v669
    %v916 = vpack.c.b16 %v676, %v673
    %v917 = vpack.c.b16 %v677, %v674
    %v918 = vpack.c.b16 %v678, %v675
    %v919 = vpack.c.b16 %v682, %v679
    %v920 = vpack.c.b16 %v683, %v680
    %v921 = vpack.c.b16 %v684, %v681
    %v922 = vpack.c.b16 %v688, %v685
    %v923 = vpack.c.b16 %v689, %v686
    %v924 = vpack.c.b16 %v690, %v687
    %v925 = vpack.c.b16 %v694, %v691
    %v926 = vpack.c.b16 %v695, %v692
    %v927 = vpack.c.b16 %v696, %v693
    %v928 = vpack.c.b16 %v700, %v697
    %v929 = vpack.c.b16 %v701, %v698
    %v930 = vpack.c.b16 %v702, %v699
    %v931 = vpack.c.b16 %v706, %v703
    %v932 = vpack.c.b16 %v707, %v704
    %v933 = vpack.c.b16 %v708, %v705
    %v934 = vpack.c.b16 %v712, %v709
    %v935 = vpack.c.b16 %v713, %v710
    %v936 = vpack.c.b16 %v714, %v711
    %v937 = vpack.c.b16 %v718, %v715
    %v938 = vpack.c.b16 %v719, %v716
    %v939 = vpack.c.b16 %v720, %v717
    %v940 = vpack.c.b16 %v724, %v721
    %v941 = vpack.c.b16 %v725, %v722
    %v942 = vpack.c.b16 %v726, %v723
    %v943 = vpack.c.b16 %v730, %v727
    %v944 = vpack.c.b16 %v731, %v728
    %v945 = vpack.c.b16 %v732, %v729
    %v946 = vpack.c.b16 %v736, %v733
    %v947 = vpack.c.b16 %v737, %v734
    %v948 = vpack.c.b16 %v738, %v735
    %v949 = vpack.c.b16 %v742, %v739
    %v950 = vpack.c.b16 %v743, %v740
    %v951 = vpack.c.b16 %v744, %v741
    %v952 = vpack.c.b16 %v748, %v745
    %v953 = vpack.c.b16 %v749, %v746
    %v954 = vpack.c.b16 %v750, %v747
    %v955 = vpack.c.b16 %v754, %v751
    %v956 = vpack.c.b16 %v755, %v752
    %v957 = vpack.c.b16 %v756, %v753
    %v958 = vpack.c.b16 %v760, %v757
    %v959 = vpack.c.b16 %v761, %v758
    %v960 = vpack.c.b16 %v762, %v759
    %v961 = vpack.c.b16 %v766, %v763
    %v962 = vpack.c.b16 %v767, %v764
    %v963 = vpack.c.b16 %v768, %v765
    %v964 = vpack.c.b16 %v772, %v769
    %v965 = vpack.c.b16 %v773, %v770
    %v966 = vpack.c.b16 %v774, %v771
    %v967 = vpack.c.b16 %v778, %v775
    %v968 = vpack.c.b16 %v779, %v776
    %v969 = vpack.c.b16 %v780, %v777
    %v970 = vpack.c.b16 %v784, %v781
    %v971 = vpack.c.b16 %v785, %v782
    %v972 = vpack.c.b16 %v786, %v783
    %v973 = vpack.c.b16 %v790, %v787
    %v974 = vpack.c.b16 %v791, %v788
    %v975 = vpack.c.b16 %v792, %v789
    %v976 = vpack.c.b16 %v796, %v793
    %v977 = vpack.c.b16 %v797, %v794
    %v978 = vpack.c.b16 %v798, %v795
    %v979 = vpack.c.b16 %v802, %v799
    %v980 = vpack.c.b16 %v803, %v800
    %v981 = vpack.c.b16 %v804, %v801
    %v982 = vpack.c.b16 %v808, %v805
    %v983 = vpack.c.b16 %v809, %v806
    %v984 = vpack.c.b16 %v810, %v807
    %v985 = vpack.c.b16 %v814, %v811
    %v986 = vpack.c.b16 %v815, %v812
    %v987 = vpack.c.b16 %v816, %v813
    %v988 = vpack.c.b16 %v820, %v817
    %v989 = vpack.c.b16 %v821, %v818
    %v990 = vpack.c.b16 %v822, %v819
    %v991 = vpack.c.b16 %v826, %v823
    %v992 = vpack.c.b16 %v827, %v824
    %v993 = vpack.c.b16 %v828, %v825
    %v994 = vpack.c.b16 %v832, %v829
    %v995 = vpack.c.b16 %v833, %v830
    %v996 = vpack.c.b16 %v834, %v831
    %v997 = vpack.c.b16 %v838, %v835
    %v998 = vpack.c.b16 %v839, %v836
    %v999 = vpack.c.b16 %v840, %v837
    %v1000 = vpack.c.b16 %v844, %v841
    %v1001 = vpack.c.b16 %v845, %v842
    %v1002 = vpack.c.b16 %v846, %v843
    %v1003 = vpack.c.b16 %v850, %v847
    %v1004 = vpack.c.b16 %v851, %v848
    %v1005 = vpack.c.b16 %v852, %v849
    %v1006 = vpack.c.b16 %v856, %v853
    %v1007 = vpack.c.b16 %v857, %v854
    %v1008 = vpack.c.b16 %v858, %v855
    %v1009 = vpack.c.b16 %v862, %v859
    %v1010 = vpack.c.b16 %v863, %v860
    %v1011 = vpack.c.b16 %v864, %v861
    %v1012 = vpack.c.b16 %v868, %v865
    %v1013 = vpack.c.b16 %v869, %v866
    %v1014 = vpack.c.b16 %v870, %v867
    %1159 = vmatprep.subr.bf16.mxu0 %v893
    %1160 = vmatpush1.bf16.msra.mxu0 %v892
    %1161 = vmatprep.subr.bf16.mxu0 %v890
    %1162 = vmatpush1.bf16.msra.mxu0 %v889
    %1163 = vmatprep.subr.bf16.mxu0 %v887
    %1164 = vmatpush1.bf16.msra.mxu0 %v886
    %1165 = vmatprep.subr.bf16.mxu0 %v884
    %1166 = vmatpush1.bf16.msra.mxu0 %v883
    %1167 = vmatprep.subr.bf16.mxu0 %v881
    %1168 = vmatpush1.bf16.msra.mxu0 %v880
    %1169 = vmatprep.subr.bf16.mxu0 %v878
    %1170 = vmatpush1.bf16.msra.mxu0 %v877
    %1171 = vmatprep.subr.bf16.mxu0 %v875
    %1172 = vmatpush1.bf16.msra.mxu0 %v874
    %1173 = vmatprep.subr.bf16.mxu0 %v872
    %1174 = vmatpush1.bf16.msra.mxu0 %v871
    %1175 = vmatprep.subr.bf16.mxu0 %v917
    %1176 = vmatpush2.bf16.msra.mxu0 %v916
    %1177 = vmatprep.subr.bf16.mxu0 %v914
    %1178 = vmatpush2.bf16.msra.mxu0 %v913
    %1179 = vmatprep.subr.bf16.mxu0 %v911
    %1180 = vmatpush2.bf16.msra.mxu0 %v910
    %1181 = vmatprep.subr.bf16.mxu0 %v908
    %1182 = vmatpush2.bf16.msra.mxu0 %v907
    %1183 = vmatprep.subr.bf16.mxu0 %v905
    %1184 = vmatpush2.bf16.msra.mxu0 %v904
    %1185 = vmatprep.subr.bf16.mxu0 %v902
    %1186 = vmatpush2.bf16.msra.mxu0 %v901
    %1187 = vmatprep.subr.bf16.mxu0 %v899
    %1188 = vmatpush2.bf16.msra.mxu0 %v898
    %1189 = vmatprep.subr.bf16.mxu0 %v896
    %1190 = vmatpush2.bf16.msra.mxu0 %v895
    %1191 = vmatprep.mubr.bf16.mxu0 %v380
    %1192 = vmatmul.mubr.bf16.gmra.mxu0 %v379
    %v1193 = vpop.f32.mrf.mxu0
    %v1194 = vadd.f32 %v349, %v1193
    %v1195 = vpop.f32.mrf.mxu0
    %v1196 = vadd.f32 %v353, %v1195
    %v1197 = vpop.f32.mrf.mxu0
    %v1198 = vadd.f32 %v349, %v1197
    %v1199 = vpop.f32.mrf.mxu0
    %v1200 = vadd.f32 %v353, %v1199
    %1201 = vdwg.mxu0
    %1202 = vmatprep.subr.bf16.mxu0 %v941
    %1203 = vmatpush1.bf16.msra.mxu0 %v940
    %1204 = vmatprep.subr.bf16.mxu0 %v938
    %1205 = vmatpush1.bf16.msra.mxu0 %v937
    %1206 = vmatprep.subr.bf16.mxu0 %v935
    %1207 = vmatpush1.bf16.msra.mxu0 %v934
    %1208 = vmatprep.subr.bf16.mxu0 %v932
    %1209 = vmatpush1.bf16.msra.mxu0 %v931
    %1210 = vmatprep.subr.bf16.mxu0 %v929
    %1211 = vmatpush1.bf16.msra.mxu0 %v928
    %1212 = vmatprep.subr.bf16.mxu0 %v926
    %1213 = vmatpush1.bf16.msra.mxu0 %v925
    %1214 = vmatprep.subr.bf16.mxu0 %v923
    %1215 = vmatpush1.bf16.msra.mxu0 %v922
    %1216 = vmatprep.subr.bf16.mxu0 %v920
    %1217 = vmatpush1.bf16.msra.mxu0 %v919
    %1218 = vmatprep.subr.bf16.mxu0 %v965
    %1219 = vmatpush2.bf16.msra.mxu0 %v964
    %1220 = vmatprep.subr.bf16.mxu0 %v962
    %1221 = vmatpush2.bf16.msra.mxu0 %v961
    %1222 = vmatprep.subr.bf16.mxu0 %v959
    %1223 = vmatpush2.bf16.msra.mxu0 %v958
    %1224 = vmatprep.subr.bf16.mxu0 %v956
    %1225 = vmatpush2.bf16.msra.mxu0 %v955
    %1226 = vmatprep.subr.bf16.mxu0 %v953
    %1227 = vmatpush2.bf16.msra.mxu0 %v952
    %1228 = vmatprep.subr.bf16.mxu0 %v950
    %1229 = vmatpush2.bf16.msra.mxu0 %v949
    %1230 = vmatprep.subr.bf16.mxu0 %v947
    %1231 = vmatpush2.bf16.msra.mxu0 %v946
    %1232 = vmatprep.subr.bf16.mxu0 %v944
    %1233 = vmatpush2.bf16.msra.mxu0 %v943
    %1234 = vmatprep.mubr.bf16.mxu0 %v382
    %1235 = vmatmul.mubr.bf16.gmra.mxu0 %v381
    %v1236 = vpop.f32.mrf.mxu0
    %v1237 = vadd.f32 %v1194, %v1236
    %v1238 = vpop.f32.mrf.mxu0
    %v1239 = vadd.f32 %v1196, %v1238
    %v1240 = vpop.f32.mrf.mxu0
    %v1241 = vadd.f32 %v1198, %v1240
    %v1242 = vpop.f32.mrf.mxu0
    %v1243 = vadd.f32 %v1200, %v1242
    %1244 = vdwg.mxu0
    %1245 = vmatprep.subr.bf16.mxu0 %v989
    %1246 = vmatpush1.bf16.msra.mxu0 %v988
    %1247 = vmatprep.subr.bf16.mxu0 %v986
    %1248 = vmatpush1.bf16.msra.mxu0 %v985
    %1249 = vmatprep.subr.bf16.mxu0 %v983
    %1250 = vmatpush1.bf16.msra.mxu0 %v982
    %1251 = vmatprep.subr.bf16.mxu0 %v980
    %1252 = vmatpush1.bf16.msra.mxu0 %v979
    %1253 = vmatprep.subr.bf16.mxu0 %v977
    %1254 = vmatpush1.bf16.msra.mxu0 %v976
    %1255 = vmatprep.subr.bf16.mxu0 %v974
    %1256 = vmatpush1.bf16.msra.mxu0 %v973
    %1257 = vmatprep.subr.bf16.mxu0 %v971
    %1258 = vmatpush1.bf16.msra.mxu0 %v970
    %1259 = vmatprep.subr.bf16.mxu0 %v968
    %1260 = vmatpush1.bf16.msra.mxu0 %v967
    %1261 = vmatprep.subr.bf16.mxu0 %v1013
    %1262 = vmatpush2.bf16.msra.mxu0 %v1012
    %1263 = vmatprep.subr.bf16.mxu0 %v1010
    %1264 = vmatpush2.bf16.msra.mxu0 %v1009
    %1265 = vmatprep.subr.bf16.mxu0 %v1007
    %1266 = vmatpush2.bf16.msra.mxu0 %v1006
    %1267 = vmatprep.subr.bf16.mxu0 %v1004
    %1268 = vmatpush2.bf16.msra.mxu0 %v1003
    %1269 = vmatprep.subr.bf16.mxu0 %v1001
    %1270 = vmatpush2.bf16.msra.mxu0 %v1000
    %1271 = vmatprep.subr.bf16.mxu0 %v998
    %1272 = vmatpush2.bf16.msra.mxu0 %v997
    %1273 = vmatprep.subr.bf16.mxu0 %v995
    %1274 = vmatpush2.bf16.msra.mxu0 %v994
    %1275 = vmatprep.subr.bf16.mxu0 %v992
    %1276 = vmatpush2.bf16.msra.mxu0 %v991
    %1277 = vmatprep.mubr.bf16.mxu0 %v384
    %1278 = vmatmul.mubr.bf16.gmra.mxu0 %v383
    %v1279 = vpop.f32.mrf.mxu0
    %v1280 = vadd.f32 %v1237, %v1279
    %v1281 = vpop.f32.mrf.mxu0
    %v1282 = vadd.f32 %v1239, %v1281
    %v1283 = vpop.f32.mrf.mxu0
    %v1284 = vadd.f32 %v1241, %v1283
    %v1285 = vpop.f32.mrf.mxu0
    %v1286 = vadd.f32 %v1243, %v1285
    %1287 = vdwg.mxu0
    %1288 = vmatprep.subr.bf16.mxu0 0
    %1289 = vmatpush1.bf16.msra.mxu0 %v894
    %1290 = vmatprep.subr.bf16.mxu0 0
    %1291 = vmatpush1.bf16.msra.mxu0 %v891
    %1292 = vmatprep.subr.bf16.mxu0 0
    %1293 = vmatpush1.bf16.msra.mxu0 %v888
    %1294 = vmatprep.subr.bf16.mxu0 0
    %1295 = vmatpush1.bf16.msra.mxu0 %v885
    %1296 = vmatprep.subr.bf16.mxu0 0
    %1297 = vmatpush1.bf16.msra.mxu0 %v882
    %1298 = vmatprep.subr.bf16.mxu0 0
    %1299 = vmatpush1.bf16.msra.mxu0 %v879
    %1300 = vmatprep.subr.bf16.mxu0 0
    %1301 = vmatpush1.bf16.msra.mxu0 %v876
    %1302 = vmatprep.subr.bf16.mxu0 0
    %1303 = vmatpush1.bf16.msra.mxu0 %v873
    %1304 = vmatprep.subr.bf16.mxu0 0
    %1305 = vmatpush2.bf16.msra.mxu0 %v918
    %1306 = vmatprep.subr.bf16.mxu0 0
    %1307 = vmatpush2.bf16.msra.mxu0 %v915
    %1308 = vmatprep.subr.bf16.mxu0 0
    %1309 = vmatpush2.bf16.msra.mxu0 %v912
    %1310 = vmatprep.subr.bf16.mxu0 0
    %1311 = vmatpush2.bf16.msra.mxu0 %v909
    %1312 = vmatprep.subr.bf16.mxu0 0
    %1313 = vmatpush2.bf16.msra.mxu0 %v906
    %1314 = vmatprep.subr.bf16.mxu0 0
    %1315 = vmatpush2.bf16.msra.mxu0 %v903
    %1316 = vmatprep.subr.bf16.mxu0 0
    %1317 = vmatpush2.bf16.msra.mxu0 %v900
    %1318 = vmatprep.subr.bf16.mxu0 0
    %1319 = vmatpush2.bf16.msra.mxu0 %v897
    %1320 = vmatprep.mubr.bf16.mxu0 %v380
    %1321 = vmatmul.mubr.bf16.gmra.mxu0 %v379
    %v1322 = vpop.f32.mrf.mxu0
    %v1323 = vadd.f32 %v357, %v1322
    %v1324 = vpop.f32.mrf.mxu0
    %v1325 = vpop.f32.mrf.mxu0
    %v1326 = vadd.f32 %v357, %v1325
    %v1327 = vpop.f32.mrf.mxu0
    %1328 = vdwg.mxu0
    %1329 = vmatprep.subr.bf16.mxu0 0
    %1330 = vmatpush1.bf16.msra.mxu0 %v942
    %1331 = vmatprep.subr.bf16.mxu0 0
    %1332 = vmatpush1.bf16.msra.mxu0 %v939
    %1333 = vmatprep.subr.bf16.mxu0 0
    %1334 = vmatpush1.bf16.msra.mxu0 %v936
    %1335 = vmatprep.subr.bf16.mxu0 0
    %1336 = vmatpush1.bf16.msra.mxu0 %v933
    %1337 = vmatprep.subr.bf16.mxu0 0
    %1338 = vmatpush1.bf16.msra.mxu0 %v930
    %1339 = vmatprep.subr.bf16.mxu0 0
    %1340 = vmatpush1.bf16.msra.mxu0 %v927
    %1341 = vmatprep.subr.bf16.mxu0 0
    %1342 = vmatpush1.bf16.msra.mxu0 %v924
    %1343 = vmatprep.subr.bf16.mxu0 0
    %1344 = vmatpush1.bf16.msra.mxu0 %v921
    %1345 = vmatprep.subr.bf16.mxu0 0
    %1346 = vmatpush2.bf16.msra.mxu0 %v966
    %1347 = vmatprep.subr.bf16.mxu0 0
    %1348 = vmatpush2.bf16.msra.mxu0 %v963
    %1349 = vmatprep.subr.bf16.mxu0 0
    %1350 = vmatpush2.bf16.msra.mxu0 %v960
    %1351 = vmatprep.subr.bf16.mxu0 0
    %1352 = vmatpush2.bf16.msra.mxu0 %v957
    %1353 = vmatprep.subr.bf16.mxu0 0
    %1354 = vmatpush2.bf16.msra.mxu0 %v954
    %1355 = vmatprep.subr.bf16.mxu0 0
    %1356 = vmatpush2.bf16.msra.mxu0 %v951
    %1357 = vmatprep.subr.bf16.mxu0 0
    %1358 = vmatpush2.bf16.msra.mxu0 %v948
    %1359 = vmatprep.subr.bf16.mxu0 0
    %1360 = vmatpush2.bf16.msra.mxu0 %v945
    %1361 = vmatprep.mubr.bf16.mxu0 %v382
    %1362 = vmatmul.mubr.bf16.gmra.mxu0 %v381
    %v1363 = vpop.f32.mrf.mxu0
    %v1364 = vadd.f32 %v1323, %v1363
    %v1365 = vpop.f32.mrf.mxu0
    %v1366 = vpop.f32.mrf.mxu0
    %v1367 = vadd.f32 %v1326, %v1366
    %v1368 = vpop.f32.mrf.mxu0
    %1369 = vdwg.mxu0
    %1370 = vmatprep.subr.bf16.mxu0 0
    %1371 = vmatpush1.bf16.msra.mxu0 %v990
    %1372 = vmatprep.subr.bf16.mxu0 0
    %1373 = vmatpush1.bf16.msra.mxu0 %v987
    %1374 = vmatprep.subr.bf16.mxu0 0
    %1375 = vmatpush1.bf16.msra.mxu0 %v984
    %1376 = vmatprep.subr.bf16.mxu0 0
    %1377 = vmatpush1.bf16.msra.mxu0 %v981
    %1378 = vmatprep.subr.bf16.mxu0 0
    %1379 = vmatpush1.bf16.msra.mxu0 %v978
    %1380 = vmatprep.subr.bf16.mxu0 0
    %1381 = vmatpush1.bf16.msra.mxu0 %v975
    %1382 = vmatprep.subr.bf16.mxu0 0
    %1383 = vmatpush1.bf16.msra.mxu0 %v972
    %1384 = vmatprep.subr.bf16.mxu0 0
    %1385 = vmatpush1.bf16.msra.mxu0 %v969
    %1386 = vmatprep.subr.bf16.mxu0 0
    %1387 = vmatpush2.bf16.msra.mxu0 %v1014
    %1388 = vmatprep.subr.bf16.mxu0 0
    %1389 = vmatpush2.bf16.msra.mxu0 %v1011
    %1390 = vmatprep.subr.bf16.mxu0 0
    %1391 = vmatpush2.bf16.msra.mxu0 %v1008
    %1392 = vmatprep.subr.bf16.mxu0 0
    %1393 = vmatpush2.bf16.msra.mxu0 %v1005
    %1394 = vmatprep.subr.bf16.mxu0 0
    %1395 = vmatpush2.bf16.msra.mxu0 %v1002
    %1396 = vmatprep.subr.bf16.mxu0 0
    %1397 = vmatpush2.bf16.msra.mxu0 %v999
    %1398 = vmatprep.subr.bf16.mxu0 0
    %1399 = vmatpush2.bf16.msra.mxu0 %v996
    %1400 = vmatprep.subr.bf16.mxu0 0
    %1401 = vmatpush2.bf16.msra.mxu0 %v993
    %1402 = vmatprep.mubr.bf16.mxu0 %v384
    %1403 = vmatmul.mubr.bf16.gmra.mxu0 %v383
    %v1404 = vpop.f32.mrf.mxu0
    %v1405 = vadd.f32 %v1364, %v1404
    %v1406 = vpop.f32.mrf.mxu0
    %v1407 = vpop.f32.mrf.mxu0
    %v1408 = vadd.f32 %v1367, %v1407
    %v1409 = vpop.f32.mrf.mxu0
    %1410 = vdwg.mxu0
    %v1411 = vmax.f32 %v1280, 0.0
    %v1412 = vmax.f32 %v1282, 0.0
    %v1413 = vmax.f32 %v1405, 0.0
    %v1414 = vmax.f32 %v1284, 0.0
    %v1415 = vmax.f32 %v1286, 0.0
    %v1416 = vmax.f32 %v1408, 0.0
    %v1417 = vpack.c.bf16 %v1414, %v1411
    %v1418 = vpack.c.bf16 %v1415, %v1412
    %v1419 = vpack.c.bf16 %v1416, %v1413
    %v1420 = vld [vmem:[#allocation10] sm:$0xf]
    %v1421 = vld [vmem:[#allocation10 + $0x4] sm:$0xf]
    %v1422 = vld [vmem:[#allocation10 + $0x8] sm:$0xf]
    %v1423 = vld [vmem:[#allocation10 + $0xc] sm:$0xf]
    %v1424 = vld [vmem:[#allocation10 + $0x10] sm:$0xf]
    %v1425 = vld [vmem:[#allocation10 + $0x14] sm:$0xf]
    %v1426 = vld [vmem:[#allocation10 + $0x18] sm:$0xf]
    %v1427 = vld [vmem:[#allocation10 + $0x1c] sm:$0xf]
    %v1428 = vld [vmem:[#allocation10 + $0x20] sm:$0xf]
    %v1429 = vld [vmem:[#allocation10 + $0x24] sm:$0xf]
    %v1430 = vld [vmem:[#allocation10 + $0x28] sm:$0xf]
    %v1431 = vld [vmem:[#allocation10 + $0x2c] sm:$0xf]
    %v1432 = vld [vmem:[#allocation10 + $0x30] sm:$0xf]
    %v1433 = vld [vmem:[#allocation10 + $0x34] sm:$0xf]
    %v1434 = vld [vmem:[#allocation10 + $0x38] sm:$0xf]
    %v1435 = vld [vmem:[#allocation10 + $0x3c] sm:$0xf]
    %v1436 = vld [vmem:[#allocation10 + $0x40] sm:$0xf]
    %v1437 = vld [vmem:[#allocation10 + $0x44] sm:$0xf]
    %v1438 = vld [vmem:[#allocation10 + $0x48] sm:$0xf]
    %v1439 = vld [vmem:[#allocation10 + $0x4c] sm:$0xf]
    %v1440 = vld [vmem:[#allocation10 + $0x50] sm:$0xf]
    %v1441 = vld [vmem:[#allocation10 + $0x54] sm:$0xf]
    %v1442 = vld [vmem:[#allocation10 + $0x58] sm:$0xf]
    %v1443 = vld [vmem:[#allocation10 + $0x5c] sm:$0xf]
    %v1444 = vld [vmem:[#allocation10 + $0x60] sm:$0xf]
    %v1445 = vld [vmem:[#allocation10 + $0x64] sm:$0xf]
    %v1446 = vld [vmem:[#allocation10 + $0x68] sm:$0xf]
    %v1447 = vld [vmem:[#allocation10 + $0x6c] sm:$0xf]
    %v1448 = vld [vmem:[#allocation10 + $0x70] sm:$0xf]
    %v1449 = vld [vmem:[#allocation10 + $0x74] sm:$0xf]
    %v1450 = vld [vmem:[#allocation10 + $0x78] sm:$0xf]
    %v1451 = vld [vmem:[#allocation10 + $0x7c] sm:$0xf]
    %v1452 = vld [vmem:[#allocation12] sm:$0x1]
    %v1454 = vlaneseq
    %v1455 = vshrl.u32 %v1454, 7
    %v1456 = vsub.s32 0, %v1455
    %v1457 = vrot.slane %v1452, %v1456
    %v1491 = vunpack.c.l.b16 %v1420
    %v1492 = vunpack.c.l.b16 %v1421
    %v1493 = vunpack.c.l.b16 %v1422
    %v1494 = vunpack.c.l.b16 %v1423
    %v1495 = vunpack.c.l.b16 %v1424
    %v1496 = vunpack.c.l.b16 %v1425
    %v1497 = vunpack.c.l.b16 %v1426
    %v1498 = vunpack.c.l.b16 %v1427
    %v1499 = vunpack.c.l.b16 %v1428
    %v1500 = vunpack.c.l.b16 %v1429
    %v1501 = vunpack.c.l.b16 %v1430
    %v1502 = vunpack.c.l.b16 %v1431
    %v1503 = vunpack.c.l.b16 %v1432
    %v1504 = vunpack.c.l.b16 %v1433
    %v1505 = vunpack.c.l.b16 %v1434
    %v1506 = vunpack.c.l.b16 %v1435
    %v1507 = vunpack.c.l.b16 %v1436
    %v1508 = vunpack.c.l.b16 %v1437
    %v1509 = vunpack.c.l.b16 %v1438
    %v1510 = vunpack.c.l.b16 %v1439
    %v1511 = vunpack.c.l.b16 %v1440
    %v1512 = vunpack.c.l.b16 %v1441
    %v1513 = vunpack.c.l.b16 %v1442
    %v1514 = vunpack.c.l.b16 %v1443
    %v1515 = vunpack.c.l.b16 %v1444
    %v1516 = vunpack.c.l.b16 %v1445
    %v1517 = vunpack.c.l.b16 %v1446
    %v1518 = vunpack.c.l.b16 %v1447
    %v1519 = vunpack.c.l.b16 %v1448
    %v1520 = vunpack.c.l.b16 %v1449
    %v1521 = vunpack.c.l.b16 %v1450
    %v1522 = vunpack.c.l.b16 %v1451
    %v1523 = vpack.c.b16 %v1492, %v1491
    %v1524 = vpack.c.b16 %v1494, %v1493
    %v1525 = vpack.c.b16 %v1496, %v1495
    %v1526 = vpack.c.b16 %v1498, %v1497
    %v1527 = vpack.c.b16 %v1500, %v1499
    %v1528 = vpack.c.b16 %v1502, %v1501
    %v1529 = vpack.c.b16 %v1504, %v1503
    %v1530 = vpack.c.b16 %v1506, %v1505
    %v1531 = vpack.c.b16 %v1508, %v1507
    %v1532 = vpack.c.b16 %v1510, %v1509
    %v1533 = vpack.c.b16 %v1512, %v1511
    %v1534 = vpack.c.b16 %v1514, %v1513
    %v1535 = vpack.c.b16 %v1516, %v1515
    %v1536 = vpack.c.b16 %v1518, %v1517
    %v1537 = vpack.c.b16 %v1520, %v1519
    %v1538 = vpack.c.b16 %v1522, %v1521
    %1555 = vmatprep.subr.bf16.mxu0 0
    %1556 = vmatpush1.bf16.msra.mxu0 %v1530
    %1557 = vmatprep.subr.bf16.mxu0 0
    %1558 = vmatpush1.bf16.msra.mxu0 %v1529
    %1559 = vmatprep.subr.bf16.mxu0 0
    %1560 = vmatpush1.bf16.msra.mxu0 %v1528
    %1561 = vmatprep.subr.bf16.mxu0 0
    %1562 = vmatpush1.bf16.msra.mxu0 %v1527
    %1563 = vmatprep.subr.bf16.mxu0 0
    %1564 = vmatpush1.bf16.msra.mxu0 %v1526
    %1565 = vmatprep.subr.bf16.mxu0 0
    %1566 = vmatpush1.bf16.msra.mxu0 %v1525
    %1567 = vmatprep.subr.bf16.mxu0 0
    %1568 = vmatpush1.bf16.msra.mxu0 %v1524
    %1569 = vmatprep.subr.bf16.mxu0 0
    %1570 = vmatpush1.bf16.msra.mxu0 %v1523
    %1571 = vmatprep.subr.bf16.mxu0 0
    %1572 = vmatpush2.bf16.msra.mxu0 %v1538
    %1573 = vmatprep.subr.bf16.mxu0 0
    %1574 = vmatpush2.bf16.msra.mxu0 %v1537
    %1575 = vmatprep.subr.bf16.mxu0 0
    %1576 = vmatpush2.bf16.msra.mxu0 %v1536
    %1577 = vmatprep.subr.bf16.mxu0 0
    %1578 = vmatpush2.bf16.msra.mxu0 %v1535
    %1579 = vmatprep.subr.bf16.mxu0 0
    %1580 = vmatpush2.bf16.msra.mxu0 %v1534
    %1581 = vmatprep.subr.bf16.mxu0 0
    %1582 = vmatpush2.bf16.msra.mxu0 %v1533
    %1583 = vmatprep.subr.bf16.mxu0 0
    %1584 = vmatpush2.bf16.msra.mxu0 %v1532
    %1585 = vmatprep.subr.bf16.mxu0 0
    %1586 = vmatpush2.bf16.msra.mxu0 %v1531
    %1587 = vmatprep.mubr.bf16.mxu0 %v1418
    %1588 = vmatmul.mubr.bf16.gmra.mxu0 %v1417
    %v1589 = vpop.f32.mrf.mxu0
    %v1590 = vadd.f32 %v1457, %v1589
    %v1591 = vpop.f32.mrf.mxu0
    %v1592 = vpop.f32.mrf.mxu0
    %v1593 = vadd.f32 %v1457, %v1592
    %v1594 = vpop.f32.mrf.mxu0
    %1595 = vdwg.mxu0
    %v1596 = vmax.f32 %v1590, 0.0
    %v1597 = vmax.f32 %v1593, 0.0
    %v1598 = vpack.c.bf16 %v1597, %v1596
    %v1599 = vld [vmem:[#allocation13] sm:$0xf]
    %v1600 = vld [vmem:[#allocation13 + $0x4] sm:$0xf]
    %v1601 = vld [vmem:[#allocation13 + $0x8] sm:$0xf]
    %v1602 = vld [vmem:[#allocation13 + $0xc] sm:$0xf]
    %v1603 = vld [vmem:[#allocation13 + $0x10] sm:$0xf]
    %v1604 = vld [vmem:[#allocation13 + $0x14] sm:$0xf]
    %v1605 = vld [vmem:[#allocation13 + $0x18] sm:$0xf]
    %v1606 = vld [vmem:[#allocation13 + $0x1c] sm:$0xf]
    %v1607 = vld [vmem:[#allocation13 + $0x20] sm:$0xf]
    %v1608 = vld [vmem:[#allocation13 + $0x24] sm:$0xf]
    %v1609 = vld [vmem:[#allocation13 + $0x28] sm:$0xf]
    %v1610 = vld [vmem:[#allocation13 + $0x2c] sm:$0xf]
    %v1611 = vld [vmem:[#allocation13 + $0x30] sm:$0xf]
    %v1612 = vld [vmem:[#allocation13 + $0x34] sm:$0xf]
    %v1613 = vld [vmem:[#allocation13 + $0x38] sm:$0xf]
    %v1614 = vld [vmem:[#allocation13 + $0x3c] sm:$0xf]
    %v1615 = vld [vmem:[%s7] sm:$0x1]
    %v1617 = vlaneseq
    %v1618 = vshrl.u32 %v1617, 7
    %v1619 = vsub.s32 0, %v1618
    %v1620 = vrot.slane %v1615, %v1619
    %v1638 = vunpack.c.l.b16 %v1599
    %v1639 = vunpack.c.l.b16 %v1600
    %v1640 = vunpack.c.l.b16 %v1601
    %v1641 = vunpack.c.l.b16 %v1602
    %v1642 = vunpack.c.l.b16 %v1603
    %v1643 = vunpack.c.l.b16 %v1604
    %v1644 = vunpack.c.l.b16 %v1605
    %v1645 = vunpack.c.l.b16 %v1606
    %v1646 = vunpack.c.l.b16 %v1607
    %v1647 = vunpack.c.l.b16 %v1608
    %v1648 = vunpack.c.l.b16 %v1609
    %v1649 = vunpack.c.l.b16 %v1610
    %v1650 = vunpack.c.l.b16 %v1611
    %v1651 = vunpack.c.l.b16 %v1612
    %v1652 = vunpack.c.l.b16 %v1613
    %v1653 = vunpack.c.l.b16 %v1614
    %v1654 = vpack.c.b16 %v1639, %v1638
    %v1655 = vpack.c.b16 %v1641, %v1640
    %v1656 = vpack.c.b16 %v1643, %v1642
    %v1657 = vpack.c.b16 %v1645, %v1644
    %v1658 = vpack.c.b16 %v1647, %v1646
    %v1659 = vpack.c.b16 %v1649, %v1648
    %v1660 = vpack.c.b16 %v1651, %v1650
    %v1661 = vpack.c.b16 %v1653, %v1652
    %1670 = vmatprep.subr.bf16.mxu0 0
    %1671 = vmatpush1.bf16.msra.mxu0 %v1661
    %1672 = vmatprep.subr.bf16.mxu0 0
    %1673 = vmatpush1.bf16.msra.mxu0 %v1660
    %1674 = vmatprep.subr.bf16.mxu0 0
    %1675 = vmatpush1.bf16.msra.mxu0 %v1659
    %1676 = vmatprep.subr.bf16.mxu0 0
    %1677 = vmatpush1.bf16.msra.mxu0 %v1658
    %1678 = vmatprep.subr.bf16.mxu0 0
    %1679 = vmatpush1.bf16.msra.mxu0 %v1657
    %1680 = vmatprep.subr.bf16.mxu0 0
    %1681 = vmatpush1.bf16.msra.mxu0 %v1656
    %1682 = vmatprep.subr.bf16.mxu0 0
    %1683 = vmatpush1.bf16.msra.mxu0 %v1655
    %1684 = vmatprep.subr.bf16.mxu0 0
    %1685 = vmatpush1.bf16.msra.mxu0 %v1654
    %1686 = vmatprep.subr.bf16.mxu0 0
    %1687 = vmatpush2.bf16.msra.mxu0 0
    %1688 = vmatprep.subr.bf16.mxu0 0
    %1689 = vmatpush2.bf16.msra.mxu0 0
    %1690 = vmatprep.subr.bf16.mxu0 0
    %1691 = vmatpush2.bf16.msra.mxu0 0
    %1692 = vmatprep.subr.bf16.mxu0 0
    %1693 = vmatpush2.bf16.msra.mxu0 0
    %1694 = vmatprep.subr.bf16.mxu0 0
    %1695 = vmatpush2.bf16.msra.mxu0 0
    %1696 = vmatprep.subr.bf16.mxu0 0
    %1697 = vmatpush2.bf16.msra.mxu0 0
    %1698 = vmatprep.subr.bf16.mxu0 0
    %1699 = vmatpush2.bf16.msra.mxu0 0
    %1700 = vmatprep.subr.bf16.mxu0 0
    %1701 = vmatpush2.bf16.msra.mxu0 0
    %1702 = vmatprep.mubr.bf16.mxu0 0
    %1703 = vmatmul.mubr.bf16.gmra.mxu0 %v1598
    %v1704 = vpop.f32.mrf.mxu0
    %v1705 = vadd.f32 %v1620, %v1704
    %v1706 = vpop.f32.mrf.mxu0
    %v1707 = vpop.f32.mrf.mxu0
    %v1708 = vadd.f32 %v1620, %v1707
    %v1709 = vpop.f32.mrf.mxu0
    %1710 = vdwg.mxu0
    %1711 = vst [vmem:[#allocation16] sm:$0xff] %v1705
    %1712 = vst [vmem:[#allocation16 + $0x10] sm:$0xff] %v1708
    %v1713 = vld [vmem:[#allocation15] sm:$0xf]
    %v1714 = vld [vmem:[#allocation15 + $0x4] sm:$0xf]
    %v1715 = vld [vmem:[#allocation15 + $0x8] sm:$0xf]
    %v1716 = vld [vmem:[#allocation15 + $0xc] sm:$0xf]
    %v1717 = vld [vmem:[#allocation15 + $0x10] sm:$0xf]
    %v1718 = vld [vmem:[#allocation15 + $0x14] sm:$0xf]
    %v1719 = vld [vmem:[#allocation15 + $0x18] sm:$0xf]
    %v1720 = vld [vmem:[#allocation15 + $0x1c] sm:$0xf]
    %v1721 = vld [vmem:[#allocation15 + $0x20] sm:$0xf]
    %v1722 = vld [vmem:[#allocation15 + $0x24] sm:$0xf]
    %v1723 = vld [vmem:[#allocation15 + $0x28] sm:$0xf]
    %v1724 = vld [vmem:[#allocation15 + $0x2c] sm:$0xf]
    %v1725 = vld [vmem:[#allocation15 + $0x30] sm:$0xf]
    %v1726 = vld [vmem:[#allocation15 + $0x34] sm:$0xf]
    %v1727 = vld [vmem:[#allocation15 + $0x38] sm:$0xf]
    %v1728 = vld [vmem:[#allocation15 + $0x3c] sm:$0xf]
    %v1729 = vld [vmem:[%s9] sm:$0x1]
    %v1731 = vlaneseq
    %v1732 = vshrl.u32 %v1731, 7
    %v1733 = vsub.s32 0, %v1732
    %v1734 = vrot.slane %v1729, %v1733
    %v1752 = vunpack.c.l.b16 %v1713
    %v1753 = vunpack.c.l.b16 %v1714
    %v1754 = vunpack.c.l.b16 %v1715
    %v1755 = vunpack.c.l.b16 %v1716
    %v1756 = vunpack.c.l.b16 %v1717
    %v1757 = vunpack.c.l.b16 %v1718
    %v1758 = vunpack.c.l.b16 %v1719
    %v1759 = vunpack.c.l.b16 %v1720
    %v1760 = vunpack.c.l.b16 %v1721
    %v1761 = vunpack.c.l.b16 %v1722
    %v1762 = vunpack.c.l.b16 %v1723
    %v1763 = vunpack.c.l.b16 %v1724
    %v1764 = vunpack.c.l.b16 %v1725
    %v1765 = vunpack.c.l.b16 %v1726
    %v1766 = vunpack.c.l.b16 %v1727
    %v1767 = vunpack.c.l.b16 %v1728
    %v1768 = vpack.c.b16 %v1753, %v1752
    %v1769 = vpack.c.b16 %v1755, %v1754
    %v1770 = vpack.c.b16 %v1757, %v1756
    %v1771 = vpack.c.b16 %v1759, %v1758
    %v1772 = vpack.c.b16 %v1761, %v1760
    %v1773 = vpack.c.b16 %v1763, %v1762
    %v1774 = vpack.c.b16 %v1765, %v1764
    %v1775 = vpack.c.b16 %v1767, %v1766
    %1784 = vmatprep.subr.bf16.mxu0 0
    %1785 = vmatpush1.bf16.msra.mxu0 %v1775
    %1786 = vmatprep.subr.bf16.mxu0 0
    %1787 = vmatpush1.bf16.msra.mxu0 %v1774
    %1788 = vmatprep.subr.bf16.mxu0 0
    %1789 = vmatpush1.bf16.msra.mxu0 %v1773
    %1790 = vmatprep.subr.bf16.mxu0 0
    %1791 = vmatpush1.bf16.msra.mxu0 %v1772
    %1792 = vmatprep.subr.bf16.mxu0 0
    %1793 = vmatpush1.bf16.msra.mxu0 %v1771
    %1794 = vmatprep.subr.bf16.mxu0 0
    %1795 = vmatpush1.bf16.msra.mxu0 %v1770
    %1796 = vmatprep.subr.bf16.mxu0 0
    %1797 = vmatpush1.bf16.msra.mxu0 %v1769
    %1798 = vmatprep.subr.bf16.mxu0 0
    %1799 = vmatpush1.bf16.msra.mxu0 %v1768
    %1800 = vmatprep.subr.bf16.mxu0 0
    %1801 = vmatpush2.bf16.msra.mxu0 0
    %1802 = vmatprep.subr.bf16.mxu0 0
    %1803 = vmatpush2.bf16.msra.mxu0 0
    %1804 = vmatprep.subr.bf16.mxu0 0
    %1805 = vmatpush2.bf16.msra.mxu0 0
    %1806 = vmatprep.subr.bf16.mxu0 0
    %1807 = vmatpush2.bf16.msra.mxu0 0
    %1808 = vmatprep.subr.bf16.mxu0 0
    %1809 = vmatpush2.bf16.msra.mxu0 0
    %1810 = vmatprep.subr.bf16.mxu0 0
    %1811 = vmatpush2.bf16.msra.mxu0 0
    %1812 = vmatprep.subr.bf16.mxu0 0
    %1813 = vmatpush2.bf16.msra.mxu0 0
    %1814 = vmatprep.subr.bf16.mxu0 0
    %1815 = vmatpush2.bf16.msra.mxu0 0
    %1816 = vmatprep.mubr.bf16.mxu0 0
    %1817 = vmatmul.mubr.bf16.gmra.mxu0 %v1419
    %v1818 = vpop.f32.mrf.mxu0
    %v1819 = vadd.f32 %v1734, %v1818
    %v1820 = vpop.f32.mrf.mxu0
    %v1821 = vpop.f32.mrf.mxu0
    %v1822 = vadd.f32 %v1734, %v1821
    %v1823 = vpop.f32.mrf.mxu0
    %1824 = vdwg.mxu0
    %1825 = vst [vmem:[#allocation16 + $0x8] sm:$0xff] %v1819
    %1826 = vst [vmem:[#allocation16 + $0x18] sm:$0xff] %v1822
    // Predicated region
    $region66: #{_forward_padded.1} parent=1 // pred_check
      _
    $region67: #{_forward_padded.1} parent=1 // pred_check_branch
      %1828 = sbr.rel (0) target = $region69
    $region68: #{_forward_padded.1} parent=1 // pred_region
      %s1830 = ssub.s32 512, 512
      %1831 = vsyncadd [#allocation6], %s1830
      %s1832 = sshll.u32 [#allocation16], 4
      %s1833 = int_to_ptr.vmem [resolvable:$true] %s1832
      %1838 = dma.vmem_to_hbm [thread:$0]  %s1833, 512, %s10, [#allocation6], 256, 256, 16
    $region69: #{_forward_padded.1} parent=1 // pred_fallthru
      _
    // Predicated region
    $region70: #{_forward_padded.1} parent=1 // pred_check
      _
    $region71: #{_forward_padded.1} parent=1 // pred_check_branch
      %1840 = sbr.rel (0) target = $region73
    $region72: #{_forward_padded.1} parent=1 // pred_region
      %1841 = dma.done [#allocation6], 512
    $region73: #{_forward_padded.1} parent=1 // pred_fallthru
      _
    %1842 = vsyncpa [#allocation5], 1
    %1843 = vsyncpa [#allocation8], 1
    %1844 = vsyncpa [#allocation11], 1
    %1845 = vsyncpa [#allocation14], 1
    %1846 = vsyncpa [#allocation6], 1

</llo_original>
